<compile_context>
chip_gen: v5e
topology: v5e:2x2
jax: 0.10.0
libtpu: 0.0.40
codegen_flags: <defaults>
</compile_context>

<pallas_src>
import jax
import jax.numpy as jnp
from jax import lax
from jax.experimental import pallas as pl
from jax.experimental.pallas import tpu as pltpu


# ----------------------------- Pallas kernels ------------------------------ #

def conv_pool_kernel(p_ref, w_ref, b_ref, o_ref):
    """Fused conv-as-GEMM + 2x2 max-pool + bias + ReLU for one M tile.

    p_ref: (4, MT, Kp)  im2col patches of the 4 pooling phases (MT rows span images)
    w_ref: (Kp, 128)    packed conv weights (K zero-padded, O zero-padded to 128)
    b_ref: (1, 128)     bias (zero-padded)
    o_ref: (MT, 128)    pooled relu(conv) activation, 128-lane dense
    """
    mt = p_ref.shape[1]
    kp = p_ref.shape[2]
    # One big MXU matmul over all 4 phases (phase-major rows), instead of 4 short ones.
    p = p_ref[...].reshape(4 * mt, kp)
    y = jnp.dot(p, w_ref[...], preferred_element_type=jnp.float32)
    # Phase max = elementwise max over 4 tile-aligned slabs (VPU).
    m = jnp.maximum(jnp.maximum(y[0 * mt:1 * mt], y[1 * mt:2 * mt]),
                    jnp.maximum(y[2 * mt:3 * mt], y[3 * mt:4 * mt]))
    # relu/bias commute with the max over phases (monotonic, per-channel bias).
    o_ref[...] = jnp.maximum(m + b_ref[...], 0.0)


def fc_tail_kernel(x_ref, w1_ref, b1_ref, w2_ref, b2_ref, w3_ref, b3_ref, o_ref):
    """Fused fc1+relu -> fc2+relu -> fc3. Intermediates never leave VMEM/vregs."""
    h = jnp.dot(x_ref[...], w1_ref[...], preferred_element_type=jnp.float32)
    h = jnp.maximum(h + b1_ref[...], 0.0)
    h = jnp.dot(h, w2_ref[...], preferred_element_type=jnp.float32)
    h = jnp.maximum(h + b2_ref[...], 0.0)
    h = jnp.dot(h, w3_ref[...], preferred_element_type=jnp.float32)
    o_ref[...] = h + b3_ref[...]


# ------------------------------ Wrappers ----------------------------------- #

def _round_up(x, m):
    return (x + m - 1) // m * m


def _pad2d(a, rows, cols):
    return jnp.pad(a, ((0, rows - a.shape[0]), (0, cols - a.shape[1])))


def _pick_tile(m, cap=512):
    """Row-tile size: multiple of 8, <= cap, and >= 2 grid steps when possible
    (v7x has 2 TensorCores; irrelevant but harmless on v5e/v6e)."""
    if m <= 8:
        return 8
    half = _round_up((m + 1) // 2, 8)
    return min(cap, half)


def phase_patches(x_nhwc, K):
    """im2col patches for the 4 pooling phases, via ONE stride-1 identity-kernel
    convolution (exact) + reshape.  Returns (4, N*Ph*Pw, K*K*C) with feature order
    (kh, kw, c) — the same order the packed conv weights use — and M-row order
    (n, i, j), i.e. the pooled-output raster order."""
    N, H, W, C = x_nhwc.shape
    F = K * K * C
    eye = jnp.eye(F, dtype=x_nhwc.dtype).reshape(K, K, C, F)      # [kh,kw,c,f]
    p = lax.conv_general_dilated(
        x_nhwc, eye, window_strides=(1, 1), padding="VALID",
        dimension_numbers=("NHWC", "HWIO", "NHWC"),
        precision=lax.Precision.HIGHEST)                          # (N,Ho,Wo,F)
    Ho, Wo = H - K + 1, W - K + 1
    p = p.reshape(N, Ho // 2, 2, Wo // 2, 2, F)                   # (n,i,dh,j,dw,f)
    p = jnp.transpose(p, (2, 4, 0, 1, 3, 5))                      # (dh,dw,n,i,j,f)
    return p.reshape(4, N * (Ho // 2) * (Wo // 2), F)


def conv_pool_call(patches, w, b):
    """patches: (4, M, Kp), w: (Kp, 128), b: (1, 128) -> (M, 128)."""
    _, M, Kp = patches.shape
    MT = _pick_tile(M)
    Mp = _round_up(M, MT)
    if Mp != M:
        patches = jnp.pad(patches, ((0, 0), (0, Mp - M), (0, 0)))
    out = pl.pallas_call(
        conv_pool_kernel,
        out_shape=jax.ShapeDtypeStruct((Mp, 128), jnp.float32),
        grid=(Mp // MT,),
        in_specs=[
            pl.BlockSpec((4, MT, Kp), lambda i: (0, i, 0)),
            pl.BlockSpec((Kp, 128), lambda i: (0, 0)),
            pl.BlockSpec((1, 128), lambda i: (0, 0)),
        ],
        out_specs=pl.BlockSpec((MT, 128), lambda i: (i, 0)),
        compiler_params=pltpu.CompilerParams(
            dimension_semantics=("parallel",)),
    )(patches, w, b)
    return out[:M]


def fc_tail_call(x, w1, b1, w2, b2, w3, b3):
    """x: (N, 400) -> (N, 128) logits (first 10 lanes valid)."""
    N, Kin = x.shape
    tm = _pick_tile(N)
    Np = _round_up(N, tm)
    if Np != N:
        x = jnp.pad(x, ((0, Np - N), (0, 0)))
    out = pl.pallas_call(
        fc_tail_kernel,
        out_shape=jax.ShapeDtypeStruct((Np, 128), jnp.float32),
        grid=(Np // tm,),
        in_specs=[
            pl.BlockSpec((tm, Kin), lambda i: (i, 0)),
            pl.BlockSpec((Kin, 128), lambda i: (0, 0)),
            pl.BlockSpec((1, 128), lambda i: (0, 0)),
            pl.BlockSpec((128, 128), lambda i: (0, 0)),
            pl.BlockSpec((1, 128), lambda i: (0, 0)),
            pl.BlockSpec((128, 128), lambda i: (0, 0)),
            pl.BlockSpec((1, 128), lambda i: (0, 0)),
        ],
        out_specs=pl.BlockSpec((tm, 128), lambda i: (i, 0)),
        compiler_params=pltpu.CompilerParams(
            dimension_semantics=("parallel",)),
    )(x, w1, b1, w2, b2, w3, b3)
    return out[:N]


# ------------------------- One-time weight packing -------------------------- #

def pack_conv_weights(w_oikk, b, K, C, Kp):
    """(O,C,KH,KW) -> (Kp, 128) with rows ordered (kh, kw, c); bias -> (1,128)."""
    O = w_oikk.shape[0]
    w2 = jnp.transpose(w_oikk, (2, 3, 1, 0)).reshape(K * K * C, O)
    return _pad2d(w2, Kp, 128), _pad2d(b.reshape(1, O), 1, 128)


def pack_params(p):
    """Fold all layout permutations (NCHW flatten, padding) into the weights."""
    w1, b1 = pack_conv_weights(p["conv1_w"], p["conv1_b"], K=5, C=1, Kp=32)
    w2, b2 = pack_conv_weights(p["conv2_w"], p["conv2_b"], K=5, C=6, Kp=160)

    # fc1: torch flatten order is (c, hw) with c<16, hw<25; the kernel-side flatten
    # is (hw, c) -> permute rows once, keep K compact at 400 (8x less DMA than 3200).
    fc1 = p["fc1_w"].reshape(16, 25, 120)            # (c, hw, f)
    fc1 = jnp.transpose(fc1, (1, 0, 2)).reshape(400, 120)  # rows = hw*16 + c
    fc1 = _pad2d(fc1, 400, 128)
    fc1_b = _pad2d(p["fc1_b"].reshape(1, -1), 1, 128)
    fc2 = _pad2d(p["fc2_w"], 128, 128)
    fc2_b = _pad2d(p["fc2_b"].reshape(1, -1), 1, 128)
    fc3 = _pad2d(p["fc3_w"], 128, 128)
    fc3_b = _pad2d(p["fc3_b"].reshape(1, -1), 1, 128)
    return dict(w1=w1, b1=b1, w2=w2, b2=b2,
                fc1_w=fc1, fc1_b=fc1_b, fc2_w=fc2, fc2_b=fc2_b,
                fc3_w=fc3, fc3_b=fc3_b)


# ------------------------------ Forward pass -------------------------------- #

@jax.jit
def lenet_forward(x, pp):
    """x: (N, 1, 32, 32) float32, packed params -> logits (N, 10)."""
    N = x.shape[0]
    x_nhwc = jnp.transpose(x, (0, 2, 3, 1))                       # (N,32,32,1)

    # Stage 1: conv1 + relu + pool (one fused GEMM kernel, M batched over images)
    p1 = phase_patches(x_nhwc, K=5)                               # (4, N*196, 25)
    p1 = jnp.pad(p1, ((0, 0), (0, 0), (0, 32 - 25)))
    h1 = conv_pool_call(p1, pp["w1"], pp["b1"])                   # (N*196, 128)
    h1 = h1.reshape(N, 14, 14, 128)[..., :6]                      # (N,14,14,6)

    # Stage 2: conv2 + relu + pool (one fused GEMM kernel)
    p2 = phase_patches(h1, K=5)                                   # (4, N*25, 150)
    p2 = jnp.pad(p2, ((0, 0), (0, 0), (0, 160 - 150)))
    h2 = conv_pool_call(p2, pp["w2"], pp["b2"])                   # (N*25, 128)

    # FC tail (fused kernel) on the compacted K=400 flatten; torch's channel-major
    # flatten order is folded into the fc1 weight packing.
    hf = h2.reshape(N, 25, 128)[..., :16].reshape(N, 400)         # (N,400), rows (hw,c)
    logits = fc_tail_call(hf, pp["fc1_w"], pp["fc1_b"],
                          pp["fc2_w"], pp["fc2_b"],
                          pp["fc3_w"], pp["fc3_b"])               # (N,128)
    return logits[:, :10]


# --------------------------- Params & reference ----------------------------- #

def init_params(key):
    ks = jax.random.split(key, 10)

    def u(k, shape, fan_in):
        bound = 1.0 / (fan_in ** 0.5)
        return jax.random.uniform(k, shape, jnp.float32, -bound, bound)

    return dict(
        conv1_w=u(ks[0], (6, 1, 5, 5), 1 * 5 * 5),
        conv1_b=u(ks[1], (6,), 1 * 5 * 5),
        conv2_w=u(ks[2], (16, 6, 5, 5), 6 * 5 * 5),
        conv2_b=u(ks[3], (16,), 6 * 5 * 5),
        fc1_w=u(ks[4], (400, 120), 400),
        fc1_b=u(ks[5], (1, 120), 400),
        fc2_w=u(ks[6], (120, 84), 120),
        fc2_b=u(ks[7], (1, 84), 120),
        fc3_w=u(ks[8], (84, 10), 84),
        fc3_b=u(ks[9], (1, 10), 84),
    )


def lenet_reference(x, p):
    """Plain-JAX (XLA) reference for numerical validation (f32 precision)."""
    hi = lax.Precision.HIGHEST

    def conv(x, w, b):
        y = lax.conv_general_dilated(
            x, w, window_strides=(1, 1), padding="VALID",
            dimension_numbers=("NCHW", "OIHW", "NCHW"), precision=hi)
        return jnp.maximum(y + b.reshape(1, -1, 1, 1), 0.0)

    def pool(x):  # NCHW 2x2 max-pool
        N, C, H, W = x.shape
        return jnp.max(x.reshape(N, C, H // 2, 2, W // 2, 2), axis=(3, 5))

    h = pool(conv(x, p["conv1_w"], p["conv1_b"]))
    h = pool(conv(h, p["conv2_w"], p["conv2_b"]))
    h = h.reshape(h.shape[0], -1)
    h = jnp.maximum(jnp.dot(h, p["fc1_w"], precision=hi) + p["fc1_b"], 0.0)
    h = jnp.maximum(jnp.dot(h, p["fc2_w"], precision=hi) + p["fc2_b"], 0.0)
    return jnp.dot(h, p["fc3_w"], precision=hi) + p["fc3_b"]


if __name__ == "__main__":
    key = jax.random.PRNGKey(0)
    kx, kp = jax.random.split(key)
    params = init_params(kp)
    packed = pack_params(params)
    x = jax.random.normal(kx, (2, 1, 32, 32), dtype=jnp.float32)

    out = lenet_forward(x, packed)
    out = jax.block_until_ready(out)

    ref = lenet_reference(x, params)
    assert out.shape == (2, 10)
    assert jnp.allclose(out, ref, rtol=1e-4, atol=1e-4)
    print("KERNEL_OK")
</pallas_src>

<mosaic_0001>
module attributes {stable_mosaic.version = 11 : i64} {
  func.func @conv_pool_kernel(%arg0: i32, %arg1: memref<4x200x32xf32, #tpu.memory_space<vmem>>, %arg2: memref<32x128xf32, #tpu.memory_space<vmem>>, %arg3: memref<1x128xf32, #tpu.memory_space<vmem>>, %arg4: memref<200x128xf32, #tpu.memory_space<vmem>>) attributes {dimension_semantics = [#tpu.dimension_semantics<parallel>], iteration_bounds = array<i64: 2>, scalar_prefetch = 0 : i64, scratch_operands = 0 : i64, tpu.core_type = #tpu.core_type<tc>, window_params = [{transform_indices = @transform_0, window_bounds = array<i64: 4, 200, 32>}, {pipeline_mode = #tpu.pipeline_mode<synchronous>, transform_indices = @transform_1, window_bounds = array<i64: 32, 128>}, {pipeline_mode = #tpu.pipeline_mode<synchronous>, transform_indices = @transform_2, window_bounds = array<i64: 1, 128>}, {transform_indices = @transform_3, window_bounds = array<i64: 200, 128>}]} {
    %c0 = arith.constant 0 : index
    %c0_0 = arith.constant 0 : index
    %c0_1 = arith.constant 0 : index
    %0 = vector.load %arg1[%c0, %c0_0, %c0_1] : memref<4x200x32xf32, #tpu.memory_space<vmem>>, vector<4x200x32xf32>
    %1 = vector.shape_cast %0 : vector<4x200x32xf32> to vector<800x32xf32>
    %c0_2 = arith.constant 0 : index
    %c0_3 = arith.constant 0 : index
    %2 = vector.load %arg2[%c0_2, %c0_3] : memref<32x128xf32, #tpu.memory_space<vmem>>, vector<32x128xf32>
    %cst = arith.constant dense<0.000000e+00> : vector<800x128xf32>
    %3 = tpu.matmul %1, %2, %cst {dimension_numbers = #tpu.dot_dimension_numbers<[1], [0], [0], [1], [0, 0, 1, 1], [], []>} : vector<800x32xf32>, vector<32x128xf32>, vector<800x128xf32> -> vector<800x128xf32>
    %4 = vector.extract_strided_slice %3 {offsets = [0, 0], sizes = [200, 128], strides = [1, 1]} : vector<800x128xf32> to vector<200x128xf32>
    %5 = vector.extract_strided_slice %3 {offsets = [200, 0], sizes = [200, 128], strides = [1, 1]} : vector<800x128xf32> to vector<200x128xf32>
    %6 = arith.maximumf %4, %5 : vector<200x128xf32>
    %7 = vector.extract_strided_slice %3 {offsets = [400, 0], sizes = [200, 128], strides = [1, 1]} : vector<800x128xf32> to vector<200x128xf32>
    %8 = vector.extract_strided_slice %3 {offsets = [600, 0], sizes = [200, 128], strides = [1, 1]} : vector<800x128xf32> to vector<200x128xf32>
    %9 = arith.maximumf %7, %8 : vector<200x128xf32>
    %10 = arith.maximumf %6, %9 : vector<200x128xf32>
    %c0_4 = arith.constant 0 : index
    %c0_5 = arith.constant 0 : index
    %11 = vector.load %arg3[%c0_4, %c0_5] : memref<1x128xf32, #tpu.memory_space<vmem>>, vector<1x128xf32>
    %12 = vector.broadcast %11 : vector<1x128xf32> to vector<200x128xf32>
    %13 = arith.addf %10, %12 : vector<200x128xf32>
    %cst_6 = arith.constant 0.000000e+00 : f32
    %14 = vector.broadcast %cst_6 : f32 to vector<200x128xf32>
    %15 = arith.maximumf %13, %14 : vector<200x128xf32>
    %c0_7 = arith.constant 0 : index
    %c0_8 = arith.constant 0 : index
    %16 = vector.load %arg4[%c0_7, %c0_8] : memref<200x128xf32, #tpu.memory_space<vmem>>, vector<200x128xf32>
    tpu.vector_store %arg4[%c0_7, %c0_8], %15 {strides = array<i32>} : memref<200x128xf32, #tpu.memory_space<vmem>>, vector<200x128xf32>,
    return
  }
  func.func @transform_0(%arg0: i32) -> (i32, i32, i32) {
    %c0_i32 = arith.constant 0 : i32
    %c0_i32_0 = arith.constant 0 : i32
    %c0_i32_1 = arith.constant 0 : i32
    return %c0_i32, %arg0, %c0_i32_0 : i32, i32, i32
  }
  func.func @transform_1(%arg0: i32) -> (i32, i32) {
    %c0_i32 = arith.constant 0 : i32
    %c0_i32_0 = arith.constant 0 : i32
    %c0_i32_1 = arith.constant 0 : i32
    return %c0_i32, %c0_i32_0 : i32, i32
  }
  func.func @transform_2(%arg0: i32) -> (i32, i32) {
    %c0_i32 = arith.constant 0 : i32
    %c0_i32_0 = arith.constant 0 : i32
    %c0_i32_1 = arith.constant 0 : i32
    return %c0_i32, %c0_i32_0 : i32, i32
  }
  func.func @transform_3(%arg0: i32) -> (i32, i32) {
    %c0_i32 = arith.constant 0 : i32
    %c0_i32_0 = arith.constant 0 : i32
    return %arg0, %c0_i32 : i32, i32
  }
}

module attributes {stable_mosaic.version = 11 : i64} {
  func.func @conv_pool_kernel(%arg0: i32, %arg1: memref<4x32x160xf32, #tpu.memory_space<vmem>>, %arg2: memref<160x128xf32, #tpu.memory_space<vmem>>, %arg3: memref<1x128xf32, #tpu.memory_space<vmem>>, %arg4: memref<32x128xf32, #tpu.memory_space<vmem>>) attributes {dimension_semantics = [#tpu.dimension_semantics<parallel>], iteration_bounds = array<i64: 2>, scalar_prefetch = 0 : i64, scratch_operands = 0 : i64, tpu.core_type = #tpu.core_type<tc>, window_params = [{transform_indices = @transform_0, window_bounds = array<i64: 4, 32, 160>}, {pipeline_mode = #tpu.pipeline_mode<synchronous>, transform_indices = @transform_1, window_bounds = array<i64: 160, 128>}, {pipeline_mode = #tpu.pipeline_mode<synchronous>, transform_indices = @transform_2, window_bounds = array<i64: 1, 128>}, {transform_indices = @transform_3, window_bounds = array<i64: 32, 128>}]} {
    %c0 = arith.constant 0 : index
    %c0_0 = arith.constant 0 : index
    %c0_1 = arith.constant 0 : index
    %0 = vector.load %arg1[%c0, %c0_0, %c0_1] : memref<4x32x160xf32, #tpu.memory_space<vmem>>, vector<4x32x160xf32>
    %1 = vector.shape_cast %0 : vector<4x32x160xf32> to vector<128x160xf32>
    %c0_2 = arith.constant 0 : index
    %c0_3 = arith.constant 0 : index
    %2 = vector.load %arg2[%c0_2, %c0_3] : memref<160x128xf32, #tpu.memory_space<vmem>>, vector<160x128xf32>
    %cst = arith.constant dense<0.000000e+00> : vector<128x128xf32>
    %3 = tpu.matmul %1, %2, %cst {dimension_numbers = #tpu.dot_dimension_numbers<[1], [0], [0], [1], [0, 0, 1, 1], [], []>} : vector<128x160xf32>, vector<160x128xf32>, vector<128x128xf32> -> vector<128x128xf32>
    %4 = vector.extract_strided_slice %3 {offsets = [0, 0], sizes = [32, 128], strides = [1, 1]} : vector<128x128xf32> to vector<32x128xf32>
    %5 = vector.extract_strided_slice %3 {offsets = [32, 0], sizes = [32, 128], strides = [1, 1]} : vector<128x128xf32> to vector<32x128xf32>
    %6 = arith.maximumf %4, %5 : vector<32x128xf32>
    %7 = vector.extract_strided_slice %3 {offsets = [64, 0], sizes = [32, 128], strides = [1, 1]} : vector<128x128xf32> to vector<32x128xf32>
    %8 = vector.extract_strided_slice %3 {offsets = [96, 0], sizes = [32, 128], strides = [1, 1]} : vector<128x128xf32> to vector<32x128xf32>
    %9 = arith.maximumf %7, %8 : vector<32x128xf32>
    %10 = arith.maximumf %6, %9 : vector<32x128xf32>
    %c0_4 = arith.constant 0 : index
    %c0_5 = arith.constant 0 : index
    %11 = vector.load %arg3[%c0_4, %c0_5] : memref<1x128xf32, #tpu.memory_space<vmem>>, vector<1x128xf32>
    %12 = vector.broadcast %11 : vector<1x128xf32> to vector<32x128xf32>
    %13 = arith.addf %10, %12 : vector<32x128xf32>
    %cst_6 = arith.constant 0.000000e+00 : f32
    %14 = vector.broadcast %cst_6 : f32 to vector<32x128xf32>
    %15 = arith.maximumf %13, %14 : vector<32x128xf32>
    %c0_7 = arith.constant 0 : index
    %c0_8 = arith.constant 0 : index
    %16 = vector.load %arg4[%c0_7, %c0_8] : memref<32x128xf32, #tpu.memory_space<vmem>>, vector<32x128xf32>
    tpu.vector_store %arg4[%c0_7, %c0_8], %15 {strides = array<i32>} : memref<32x128xf32, #tpu.memory_space<vmem>>, vector<32x128xf32>,
    return
  }
  func.func @transform_0(%arg0: i32) -> (i32, i32, i32) {
    %c0_i32 = arith.constant 0 : i32
    %c0_i32_0 = arith.constant 0 : i32
    %c0_i32_1 = arith.constant 0 : i32
    return %c0_i32, %arg0, %c0_i32_0 : i32, i32, i32
  }
  func.func @transform_1(%arg0: i32) -> (i32, i32) {
    %c0_i32 = arith.constant 0 : i32
    %c0_i32_0 = arith.constant 0 : i32
    %c0_i32_1 = arith.constant 0 : i32
    return %c0_i32, %c0_i32_0 : i32, i32
  }
  func.func @transform_2(%arg0: i32) -> (i32, i32) {
    %c0_i32 = arith.constant 0 : i32
    %c0_i32_0 = arith.constant 0 : i32
    %c0_i32_1 = arith.constant 0 : i32
    return %c0_i32, %c0_i32_0 : i32, i32
  }
  func.func @transform_3(%arg0: i32) -> (i32, i32) {
    %c0_i32 = arith.constant 0 : i32
    %c0_i32_0 = arith.constant 0 : i32
    return %arg0, %c0_i32 : i32, i32
  }
}

module attributes {stable_mosaic.version = 11 : i64} {
  func.func @fc_tail_kernel(%arg0: i32, %arg1: memref<8x400xf32, #tpu.memory_space<vmem>>, %arg2: memref<400x128xf32, #tpu.memory_space<vmem>>, %arg3: memref<1x128xf32, #tpu.memory_space<vmem>>, %arg4: memref<128x128xf32, #tpu.memory_space<vmem>>, %arg5: memref<1x128xf32, #tpu.memory_space<vmem>>, %arg6: memref<128x128xf32, #tpu.memory_space<vmem>>, %arg7: memref<1x128xf32, #tpu.memory_space<vmem>>, %arg8: memref<8x128xf32, #tpu.memory_space<vmem>>) attributes {dimension_semantics = [#tpu.dimension_semantics<parallel>], iteration_bounds = array<i64: 1>, scalar_prefetch = 0 : i64, scratch_operands = 0 : i64, tpu.core_type = #tpu.core_type<tc>, window_params = [{transform_indices = @transform_0, window_bounds = array<i64: 8, 400>}, {pipeline_mode = #tpu.pipeline_mode<synchronous>, transform_indices = @transform_1, window_bounds = array<i64: 400, 128>}, {pipeline_mode = #tpu.pipeline_mode<synchronous>, transform_indices = @transform_2, window_bounds = array<i64: 1, 128>}, {pipeline_mode = #tpu.pipeline_mode<synchronous>, transform_indices = @transform_3, window_bounds = array<i64: 128, 128>}, {pipeline_mode = #tpu.pipeline_mode<synchronous>, transform_indices = @transform_4, window_bounds = array<i64: 1, 128>}, {pipeline_mode = #tpu.pipeline_mode<synchronous>, transform_indices = @transform_5, window_bounds = array<i64: 128, 128>}, {pipeline_mode = #tpu.pipeline_mode<synchronous>, transform_indices = @transform_6, window_bounds = array<i64: 1, 128>}, {transform_indices = @transform_7, window_bounds = array<i64: 8, 128>}]} {
    %c0 = arith.constant 0 : index
    %c0_0 = arith.constant 0 : index
    %0 = vector.load %arg1[%c0, %c0_0] : memref<8x400xf32, #tpu.memory_space<vmem>>, vector<8x400xf32>
    %c0_1 = arith.constant 0 : index
    %c0_2 = arith.constant 0 : index
    %1 = vector.load %arg2[%c0_1, %c0_2] : memref<400x128xf32, #tpu.memory_space<vmem>>, vector<400x128xf32>
    %cst = arith.constant dense<0.000000e+00> : vector<8x128xf32>
    %2 = tpu.matmul %0, %1, %cst {dimension_numbers = #tpu.dot_dimension_numbers<[1], [0], [0], [1], [0, 0, 1, 1], [], []>} : vector<8x400xf32>, vector<400x128xf32>, vector<8x128xf32> -> vector<8x128xf32>
    %c0_3 = arith.constant 0 : index
    %c0_4 = arith.constant 0 : index
    %3 = vector.load %arg3[%c0_3, %c0_4] : memref<1x128xf32, #tpu.memory_space<vmem>>, vector<1x128xf32>
    %4 = vector.broadcast %3 : vector<1x128xf32> to vector<8x128xf32>
    %5 = arith.addf %2, %4 : vector<8x128xf32>
    %cst_5 = arith.constant 0.000000e+00 : f32
    %6 = vector.broadcast %cst_5 : f32 to vector<8x128xf32>
    %7 = arith.maximumf %5, %6 : vector<8x128xf32>
    %c0_6 = arith.constant 0 : index
    %c0_7 = arith.constant 0 : index
    %8 = vector.load %arg4[%c0_6, %c0_7] : memref<128x128xf32, #tpu.memory_space<vmem>>, vector<128x128xf32>
    %cst_8 = arith.constant dense<0.000000e+00> : vector<8x128xf32>
    %9 = tpu.matmul %7, %8, %cst_8 {dimension_numbers = #tpu.dot_dimension_numbers<[1], [0], [0], [1], [0, 0, 1, 1], [], []>} : vector<8x128xf32>, vector<128x128xf32>, vector<8x128xf32> -> vector<8x128xf32>
    %c0_9 = arith.constant 0 : index
    %c0_10 = arith.constant 0 : index
    %10 = vector.load %arg5[%c0_9, %c0_10] : memref<1x128xf32, #tpu.memory_space<vmem>>, vector<1x128xf32>
    %11 = vector.broadcast %10 : vector<1x128xf32> to vector<8x128xf32>
    %12 = arith.addf %9, %11 : vector<8x128xf32>
    %cst_11 = arith.constant 0.000000e+00 : f32
    %13 = vector.broadcast %cst_11 : f32 to vector<8x128xf32>
    %14 = arith.maximumf %12, %13 : vector<8x128xf32>
    %c0_12 = arith.constant 0 : index
    %c0_13 = arith.constant 0 : index
    %15 = vector.load %arg6[%c0_12, %c0_13] : memref<128x128xf32, #tpu.memory_space<vmem>>, vector<128x128xf32>
    %cst_14 = arith.constant dense<0.000000e+00> : vector<8x128xf32>
    %16 = tpu.matmul %14, %15, %cst_14 {dimension_numbers = #tpu.dot_dimension_numbers<[1], [0], [0], [1], [0, 0, 1, 1], [], []>} : vector<8x128xf32>, vector<128x128xf32>, vector<8x128xf32> -> vector<8x128xf32>
    %c0_15 = arith.constant 0 : index
    %c0_16 = arith.constant 0 : index
    %17 = vector.load %arg7[%c0_15, %c0_16] : memref<1x128xf32, #tpu.memory_space<vmem>>, vector<1x128xf32>
    %18 = vector.broadcast %17 : vector<1x128xf32> to vector<8x128xf32>
    %19 = arith.addf %16, %18 : vector<8x128xf32>
    %c0_17 = arith.constant 0 : index
    %c0_18 = arith.constant 0 : index
    %20 = vector.load %arg8[%c0_17, %c0_18] : memref<8x128xf32, #tpu.memory_space<vmem>>, vector<8x128xf32>
    tpu.vector_store %arg8[%c0_17, %c0_18], %19 {strides = array<i32>} : memref<8x128xf32, #tpu.memory_space<vmem>>, vector<8x128xf32>,
    return
  }
  func.func @transform_0(%arg0: i32) -> (i32, i32) {
    %c0_i32 = arith.constant 0 : i32
    %c0_i32_0 = arith.constant 0 : i32
    return %arg0, %c0_i32 : i32, i32
  }
  func.func @transform_1(%arg0: i32) -> (i32, i32) {
    %c0_i32 = arith.constant 0 : i32
    %c0_i32_0 = arith.constant 0 : i32
    %c0_i32_1 = arith.constant 0 : i32
    return %c0_i32, %c0_i32_0 : i32, i32
  }
  func.func @transform_2(%arg0: i32) -> (i32, i32) {
    %c0_i32 = arith.constant 0 : i32
    %c0_i32_0 = arith.constant 0 : i32
    %c0_i32_1 = arith.constant 0 : i32
    return %c0_i32, %c0_i32_0 : i32, i32
  }
  func.func @transform_3(%arg0: i32) -> (i32, i32) {
    %c0_i32 = arith.constant 0 : i32
    %c0_i32_0 = arith.constant 0 : i32
    %c0_i32_1 = arith.constant 0 : i32
    return %c0_i32, %c0_i32_0 : i32, i32
  }
  func.func @transform_4(%arg0: i32) -> (i32, i32) {
    %c0_i32 = arith.constant 0 : i32
    %c0_i32_0 = arith.constant 0 : i32
    %c0_i32_1 = arith.constant 0 : i32
    return %c0_i32, %c0_i32_0 : i32, i32
  }
  func.func @transform_5(%arg0: i32) -> (i32, i32) {
    %c0_i32 = arith.constant 0 : i32
    %c0_i32_0 = arith.constant 0 : i32
    %c0_i32_1 = arith.constant 0 : i32
    return %c0_i32, %c0_i32_0 : i32, i32
  }
  func.func @transform_6(%arg0: i32) -> (i32, i32) {
    %c0_i32 = arith.constant 0 : i32
    %c0_i32_0 = arith.constant 0 : i32
    %c0_i32_1 = arith.constant 0 : i32
    return %c0_i32, %c0_i32_0 : i32, i32
  }
  func.func @transform_7(%arg0: i32) -> (i32, i32) {
    %c0_i32 = arith.constant 0 : i32
    %c0_i32_0 = arith.constant 0 : i32
    return %arg0, %c0_i32 : i32, i32
  }
}

</mosaic_0001>

<llo_original>
// kernel: lenet_forward.3
$region0: #{lenet_forward.3}
  #allocation0 [shape = 'u32[]', space=smem, size = 0x4, offset = 0x4, fixed_abs, tag = 'smem constant byte address 0x4 - core index']
  #allocation1 [shape = 'u32[72,128]{1,0:T(1,128)}', space=vmem, size = 0x9000, scoped, tag = 'internal scratch']
  %s0 = inlined_call_operand.vmem [shape: f32[4,400,32], index: 0, kind: input, shape index: {}]
  %s1 = inlined_call_operand.vmem [shape: f32[32,128], index: 1, kind: input, shape index: {}]
  %s2 = inlined_call_operand.vmem [shape: f32[1,128], index: 2, kind: input, shape index: {}]
  %s3 = inlined_call_operand.vmem [shape: f32[400,128], index: 3, kind: output, shape index: {}]
  %s4 = sld [smem:[#allocation0]]
  $region83: #{lenet_forward.3} parent=0
    _
  %s6 = ssub.s32 1, %s4
  %s7 = scalar_select 0, %s6, %s4
  $region1: #{lenet_forward.3} parent=0
    #allocation2 [shape = 'u8[819200]{0}', space=vmem, size = 0xc8000, scoped, tag = 'input window, operand 0']
    loop: start=0, step=1, limit=4
    $region2: #{lenet_forward.3} parent=1 // loop_pre_header
      _
    $region3: #{lenet_forward.3} parent=1 // loop_header
      %s9 = sphi 0, %s13
      %p10 = scmp.ge.s32.totalorder %s9, 4
      %s19 = sphi 0, %s21
      %s22 = sphi 0, %s19
      %s23 = sphi 0, %s22
      %s39 = sphi 0, %s23
      %s43 = sphi 0, %s43
      %s45 = sphi 0, %s43
      %s46 = sphi 0, %s45
      %s60 = sphi 0, %s46
      %s64 = sphi 0, %s64
      %s66 = sphi 0, %s64
      %s67 = sphi 0, %s66
      %s81 = sphi 0, %s67
      %s87 = sphi 0, %s89
      %s90 = sphi 0, %s87
      %s91 = sphi 0, %s90
      %s107 = sphi 0, %s91
    $region4: #{lenet_forward.3} parent=1 // loop_header_branch
      %12 = sbr.rel (%p10) target = $region8
    $region5: #{lenet_forward.3} parent=1 // loop_body
      %s14 = ssub.s32 %s9, 1
      %s15 = ssub.s32 %s9, 2
      %s16 = sadd.s32 %s9, 1
      %s17 = ssub.s32 %s9, %s16
      %p18 = scmp.eq.s32.totalorder %s17, 0
      %s20 = sadd.s32 %s19, 1
      %s21 = scalar_select %p18, %s19, %s20
      %p24 = pneg %p18
      %p25 = scmp.eq.s32.totalorder %s9, 1
      %p26 = por %p24, %p25
      %p27 = scmp.ne.s32.totalorder %s19, %s22
      %p28 = scmp.eq.s32.totalorder %s9, 0
      %p29 = por %p27, %p28
      %p30 = scmp.ne.s32.totalorder %s19, %s22
      %p31 = scmp.eq.s32.totalorder %s14, 1
      %p32 = por %p30, %p31
      %p33 = scmp.ne.s32.totalorder %s22, %s23
      %p34 = scmp.eq.s32.totalorder %s14, 0
      %p35 = por %p33, %p34
      %p36 = scmp.ne.s32.totalorder %s22, %s23
      %p37 = scmp.eq.s32.totalorder %s15, 1
      %p38 = por %p36, %p37
      %p40 = scmp.ne.s32.totalorder %s23, %s39
      %p41 = scmp.eq.s32.totalorder %s15, 0
      %p42 = por %p40, %p41
      %s44 = sadd.s32 %s43, 1
      %p47 = scmp.eq.s32.totalorder %s9, 1
      %p48 = scmp.ne.s32.totalorder %s43, %s45
      %p49 = scmp.eq.s32.totalorder %s9, 0
      %p50 = por %p48, %p49
      %p51 = scmp.ne.s32.totalorder %s43, %s45
      %p52 = scmp.eq.s32.totalorder %s14, 1
      %p53 = por %p51, %p52
      %p54 = scmp.ne.s32.totalorder %s45, %s46
      %p55 = scmp.eq.s32.totalorder %s14, 0
      %p56 = por %p54, %p55
      %p57 = scmp.ne.s32.totalorder %s45, %s46
      %p58 = scmp.eq.s32.totalorder %s15, 1
      %p59 = por %p57, %p58
      %p61 = scmp.ne.s32.totalorder %s46, %s60
      %p62 = scmp.eq.s32.totalorder %s15, 0
      %p63 = por %p61, %p62
      %s65 = sadd.s32 %s64, 1
      %p68 = scmp.eq.s32.totalorder %s9, 1
      %p69 = scmp.ne.s32.totalorder %s64, %s66
      %p70 = scmp.eq.s32.totalorder %s9, 0
      %p71 = por %p69, %p70
      %p72 = scmp.ne.s32.totalorder %s64, %s66
      %p73 = scmp.eq.s32.totalorder %s14, 1
      %p74 = por %p72, %p73
      %p75 = scmp.ne.s32.totalorder %s66, %s67
      %p76 = scmp.eq.s32.totalorder %s14, 0
      %p77 = por %p75, %p76
      %p78 = scmp.ne.s32.totalorder %s66, %s67
      %p79 = scmp.eq.s32.totalorder %s15, 1
      %p80 = por %p78, %p79
      %p82 = scmp.ne.s32.totalorder %s67, %s81
      %p83 = scmp.eq.s32.totalorder %s15, 0
      %p84 = por %p82, %p83
      %s85 = ssub.s32 %s9, %s16
      %p86 = scmp.eq.s32.totalorder %s85, 0
      %s88 = sadd.s32 %s87, 1
      %s89 = scalar_select %p86, %s87, %s88
      %p92 = pneg %p86
      %p93 = scmp.eq.s32.totalorder %s9, 1
      %p94 = por %p92, %p93
      %p95 = scmp.ne.s32.totalorder %s87, %s90
      %p96 = scmp.eq.s32.totalorder %s9, 0
      %p97 = por %p95, %p96
      %p98 = scmp.ne.s32.totalorder %s87, %s90
      %p99 = scmp.eq.s32.totalorder %s14, 1
      %p100 = por %p98, %p99
      %p101 = scmp.ne.s32.totalorder %s90, %s91
      %p102 = scmp.eq.s32.totalorder %s14, 0
      %p103 = por %p101, %p102
      %p104 = scmp.ne.s32.totalorder %s90, %s91
      %p105 = scmp.eq.s32.totalorder %s15, 1
      %p106 = por %p104, %p105
      %p108 = scmp.ne.s32.totalorder %s91, %s107
      %p109 = scmp.eq.s32.totalorder %s15, 0
      %p110 = por %p108, %p109
      %p111 = scmp.le.s32.totalorder 1, %s9
      %p112 = scmp.lt.s32.totalorder %s9, 3
      %p113 = pnand %p111, %p112
      %p114 = pneg %p113
      // Predicated region
      $region9: #{lenet_forward.3} parent=5 // pred_check
        _
      $region10: #{lenet_forward.3} parent=5 // pred_check_branch
        %116 = sbr.rel (%p113) target = $region12
      $region11: #{lenet_forward.3} parent=5 // pred_region
        %s117 = ssub.s32 %s9, 1
        // Predicated region
        $region13: #{lenet_forward.3} parent=11 // pred_check
          %p118 = pneg %p56
        $region14: #{lenet_forward.3} parent=11 // pred_check_branch
          %120 = sbr.rel (%p118) target = $region16
        $region15: #{lenet_forward.3} parent=11 // pred_region
          _
        $region16: #{lenet_forward.3} parent=11 // pred_fallthru
          _
        // Predicated region
        $region17: #{lenet_forward.3} parent=11 // pred_check
          %p121 = pneg %p77
        $region18: #{lenet_forward.3} parent=11 // pred_check_branch
          %123 = sbr.rel (%p121) target = $region20
        $region19: #{lenet_forward.3} parent=11 // pred_region
          _
        $region20: #{lenet_forward.3} parent=11 // pred_fallthru
          _
      $region12: #{lenet_forward.3} parent=5 // pred_fallthru
        _
      %p124 = scmp.lt.s32.totalorder %s9, 2
      // Predicated region
      $region21: #{lenet_forward.3} parent=5 // pred_check
        %p125 = pneg %p124
      $region22: #{lenet_forward.3} parent=5 // pred_check_branch
        %127 = sbr.rel (%p125) target = $region24
      $region23: #{lenet_forward.3} parent=5 // pred_region
        // Predicated region
        $region25: #{lenet_forward.3} parent=23 // pred_check
          %p128 = pneg %p29
        $region26: #{lenet_forward.3} parent=23 // pred_check_branch
          %130 = sbr.rel (%p128) target = $region28
        $region27: #{lenet_forward.3} parent=23 // pred_region
          %s131 = sand.u32 %s19, 1
          %s132 = sand.u32 %s19, 1
          %s133 = smul.addr %s132, 800
          %s134 = scalar_lea.vmem [#allocation2], %s133
          %s135 = smul.u32 25, %s9
          %s136 = smul.addr %s135, 8
          %s137 = scalar_lea.vmem %s0, %s136
          // Predicated region
          $region29: #{lenet_forward.3} parent=27 // pred_check
            _
          $region30: #{lenet_forward.3} parent=27 // pred_check_branch
            %139 = sbr.rel (0) target = $region32
          $region31: #{lenet_forward.3} parent=27 // pred_region
            // Predicated region
            $region33: #{lenet_forward.3} parent=31 // pred_check
              _
            $region34: #{lenet_forward.3} parent=31 // pred_check_branch
              %141 = sbr.rel (0) target = $region36
            $region35: #{lenet_forward.3} parent=31 // pred_region
              // Predicated region
              $region48: #{lenet_forward.3} parent=35 // pred_check
                _
              $region49: #{lenet_forward.3} parent=35 // pred_check_branch
                %355 = sbr.rel (0) target = $region51
              $region50: #{lenet_forward.3} parent=35 // pred_region
                loop: start=0, step=1, limit=1
                $region52: #{lenet_forward.3} parent=50 // loop_pre_header
                  _
                $region53: #{lenet_forward.3} parent=50 // loop_header
                  %s357 = sphi 0, %s361
                  %p358 = scmp.ge.s32.totalorder %s357, 1
                  %s362 = sphi %s137, %s137
                  %s363 = sphi %s134, %s134
                $region54: #{lenet_forward.3} parent=50 // loop_header_branch
                  %360 = sbr.rel (%p358) target = $region58
                $region55: #{lenet_forward.3} parent=50 // loop_body
                  %v364 = vld [vmem:[%s362] sm:$0xff]
                  %365 = vst [vmem:[%s363] sm:$0xff] %v364
                  %v366 = vld [vmem:[%s362 + $0x8] sm:$0xff]
                  %367 = vst [vmem:[%s363 + $0x8] sm:$0xff] %v366
                  %v368 = vld [vmem:[%s362 + $0x10] sm:$0xff]
                  %369 = vst [vmem:[%s363 + $0x10] sm:$0xff] %v368
                  %v370 = vld [vmem:[%s362 + $0x18] sm:$0xff]
                  %371 = vst [vmem:[%s363 + $0x18] sm:$0xff] %v370
                  %v372 = vld [vmem:[%s362 + $0x20] sm:$0xff]
                  %373 = vst [vmem:[%s363 + $0x20] sm:$0xff] %v372
                  %v374 = vld [vmem:[%s362 + $0x28] sm:$0xff]
                  %375 = vst [vmem:[%s363 + $0x28] sm:$0xff] %v374
                  %v376 = vld [vmem:[%s362 + $0x30] sm:$0xff]
                  %377 = vst [vmem:[%s363 + $0x30] sm:$0xff] %v376
                  %v378 = vld [vmem:[%s362 + $0x38] sm:$0xff]
                  %379 = vst [vmem:[%s363 + $0x38] sm:$0xff] %v378
                  %v380 = vld [vmem:[%s362 + $0x40] sm:$0xff]
                  %381 = vst [vmem:[%s363 + $0x40] sm:$0xff] %v380
                  %v382 = vld [vmem:[%s362 + $0x48] sm:$0xff]
                  %383 = vst [vmem:[%s363 + $0x48] sm:$0xff] %v382
                  %v384 = vld [vmem:[%s362 + $0x50] sm:$0xff]
                  %385 = vst [vmem:[%s363 + $0x50] sm:$0xff] %v384
                  %v386 = vld [vmem:[%s362 + $0x58] sm:$0xff]
                  %387 = vst [vmem:[%s363 + $0x58] sm:$0xff] %v386
                  %v388 = vld [vmem:[%s362 + $0x60] sm:$0xff]
                  %389 = vst [vmem:[%s363 + $0x60] sm:$0xff] %v388
                  %v390 = vld [vmem:[%s362 + $0x68] sm:$0xff]
                  %391 = vst [vmem:[%s363 + $0x68] sm:$0xff] %v390
                  %v392 = vld [vmem:[%s362 + $0x70] sm:$0xff]
                  %393 = vst [vmem:[%s363 + $0x70] sm:$0xff] %v392
                  %v394 = vld [vmem:[%s362 + $0x78] sm:$0xff]
                  %395 = vst [vmem:[%s363 + $0x78] sm:$0xff] %v394
                  %v396 = vld [vmem:[%s362 + $0x80] sm:$0xff]
                  %397 = vst [vmem:[%s363 + $0x80] sm:$0xff] %v396
                  %v398 = vld [vmem:[%s362 + $0x88] sm:$0xff]
                  %399 = vst [vmem:[%s363 + $0x88] sm:$0xff] %v398
                  %v400 = vld [vmem:[%s362 + $0x90] sm:$0xff]
                  %401 = vst [vmem:[%s363 + $0x90] sm:$0xff] %v400
                  %v402 = vld [vmem:[%s362 + $0x98] sm:$0xff]
                  %403 = vst [vmem:[%s363 + $0x98] sm:$0xff] %v402
                  %v404 = vld [vmem:[%s362 + $0xa0] sm:$0xff]
                  %405 = vst [vmem:[%s363 + $0xa0] sm:$0xff] %v404
                  %v406 = vld [vmem:[%s362 + $0xa8] sm:$0xff]
                  %407 = vst [vmem:[%s363 + $0xa8] sm:$0xff] %v406
                  %v408 = vld [vmem:[%s362 + $0xb0] sm:$0xff]
                  %409 = vst [vmem:[%s363 + $0xb0] sm:$0xff] %v408
                  %v410 = vld [vmem:[%s362 + $0xb8] sm:$0xff]
                  %411 = vst [vmem:[%s363 + $0xb8] sm:$0xff] %v410
                  %v412 = vld [vmem:[%s362 + $0xc0] sm:$0xff]
                  %413 = vst [vmem:[%s363 + $0xc0] sm:$0xff] %v412
                  %v414 = vld [vmem:[%s362 + $0x190] sm:$0xff]
                  %415 = vst [vmem:[%s363 + $0xc8] sm:$0xff] %v414
                  %v416 = vld [vmem:[%s362 + $0x198] sm:$0xff]
                  %417 = vst [vmem:[%s363 + $0xd0] sm:$0xff] %v416
                  %v418 = vld [vmem:[%s362 + $0x1a0] sm:$0xff]
                  %419 = vst [vmem:[%s363 + $0xd8] sm:$0xff] %v418
                  %v420 = vld [vmem:[%s362 + $0x1a8] sm:$0xff]
                  %421 = vst [vmem:[%s363 + $0xe0] sm:$0xff] %v420
                  %v422 = vld [vmem:[%s362 + $0x1b0] sm:$0xff]
                  %423 = vst [vmem:[%s363 + $0xe8] sm:$0xff] %v422
                  %v424 = vld [vmem:[%s362 + $0x1b8] sm:$0xff]
                  %425 = vst [vmem:[%s363 + $0xf0] sm:$0xff] %v424
                  %v426 = vld [vmem:[%s362 + $0x1c0] sm:$0xff]
                  %427 = vst [vmem:[%s363 + $0xf8] sm:$0xff] %v426
                  %v428 = vld [vmem:[%s362 + $0x1c8] sm:$0xff]
                  %429 = vst [vmem:[%s363 + $0x100] sm:$0xff] %v428
                  %v430 = vld [vmem:[%s362 + $0x1d0] sm:$0xff]
                  %431 = vst [vmem:[%s363 + $0x108] sm:$0xff] %v430
                  %v432 = vld [vmem:[%s362 + $0x1d8] sm:$0xff]
                  %433 = vst [vmem:[%s363 + $0x110] sm:$0xff] %v432
                  %v434 = vld [vmem:[%s362 + $0x1e0] sm:$0xff]
                  %435 = vst [vmem:[%s363 + $0x118] sm:$0xff] %v434
                  %v436 = vld [vmem:[%s362 + $0x1e8] sm:$0xff]
                  %437 = vst [vmem:[%s363 + $0x120] sm:$0xff] %v436
                  %v438 = vld [vmem:[%s362 + $0x1f0] sm:$0xff]
                  %439 = vst [vmem:[%s363 + $0x128] sm:$0xff] %v438
                  %v440 = vld [vmem:[%s362 + $0x1f8] sm:$0xff]
                  %441 = vst [vmem:[%s363 + $0x130] sm:$0xff] %v440
                  %v442 = vld [vmem:[%s362 + $0x200] sm:$0xff]
                  %443 = vst [vmem:[%s363 + $0x138] sm:$0xff] %v442
                  %v444 = vld [vmem:[%s362 + $0x208] sm:$0xff]
                  %445 = vst [vmem:[%s363 + $0x140] sm:$0xff] %v444
                  %v446 = vld [vmem:[%s362 + $0x210] sm:$0xff]
                  %447 = vst [vmem:[%s363 + $0x148] sm:$0xff] %v446
                  %v448 = vld [vmem:[%s362 + $0x218] sm:$0xff]
                  %449 = vst [vmem:[%s363 + $0x150] sm:$0xff] %v448
                  %v450 = vld [vmem:[%s362 + $0x220] sm:$0xff]
                  %451 = vst [vmem:[%s363 + $0x158] sm:$0xff] %v450
                  %v452 = vld [vmem:[%s362 + $0x228] sm:$0xff]
                  %453 = vst [vmem:[%s363 + $0x160] sm:$0xff] %v452
                  %v454 = vld [vmem:[%s362 + $0x230] sm:$0xff]
                  %455 = vst [vmem:[%s363 + $0x168] sm:$0xff] %v454
                  %v456 = vld [vmem:[%s362 + $0x238] sm:$0xff]
                  %457 = vst [vmem:[%s363 + $0x170] sm:$0xff] %v456
                  %v458 = vld [vmem:[%s362 + $0x240] sm:$0xff]
                  %459 = vst [vmem:[%s363 + $0x178] sm:$0xff] %v458
                  %v460 = vld [vmem:[%s362 + $0x248] sm:$0xff]
                  %461 = vst [vmem:[%s363 + $0x180] sm:$0xff] %v460
                  %v462 = vld [vmem:[%s362 + $0x250] sm:$0xff]
                  %463 = vst [vmem:[%s363 + $0x188] sm:$0xff] %v462
                  %v464 = vld [vmem:[%s362 + $0x320] sm:$0xff]
                  %465 = vst [vmem:[%s363 + $0x190] sm:$0xff] %v464
                  %v466 = vld [vmem:[%s362 + $0x328] sm:$0xff]
                  %467 = vst [vmem:[%s363 + $0x198] sm:$0xff] %v466
                  %v468 = vld [vmem:[%s362 + $0x330] sm:$0xff]
                  %469 = vst [vmem:[%s363 + $0x1a0] sm:$0xff] %v468
                  %v470 = vld [vmem:[%s362 + $0x338] sm:$0xff]
                  %471 = vst [vmem:[%s363 + $0x1a8] sm:$0xff] %v470
                  %v472 = vld [vmem:[%s362 + $0x340] sm:$0xff]
                  %473 = vst [vmem:[%s363 + $0x1b0] sm:$0xff] %v472
                  %v474 = vld [vmem:[%s362 + $0x348] sm:$0xff]
                  %475 = vst [vmem:[%s363 + $0x1b8] sm:$0xff] %v474
                  %v476 = vld [vmem:[%s362 + $0x350] sm:$0xff]
                  %477 = vst [vmem:[%s363 + $0x1c0] sm:$0xff] %v476
                  %v478 = vld [vmem:[%s362 + $0x358] sm:$0xff]
                  %479 = vst [vmem:[%s363 + $0x1c8] sm:$0xff] %v478
                  %v480 = vld [vmem:[%s362 + $0x360] sm:$0xff]
                  %481 = vst [vmem:[%s363 + $0x1d0] sm:$0xff] %v480
                  %v482 = vld [vmem:[%s362 + $0x368] sm:$0xff]
                  %483 = vst [vmem:[%s363 + $0x1d8] sm:$0xff] %v482
                  %v484 = vld [vmem:[%s362 + $0x370] sm:$0xff]
                  %485 = vst [vmem:[%s363 + $0x1e0] sm:$0xff] %v484
                  %v486 = vld [vmem:[%s362 + $0x378] sm:$0xff]
                  %487 = vst [vmem:[%s363 + $0x1e8] sm:$0xff] %v486
                  %v488 = vld [vmem:[%s362 + $0x380] sm:$0xff]
                  %489 = vst [vmem:[%s363 + $0x1f0] sm:$0xff] %v488
                  %v490 = vld [vmem:[%s362 + $0x388] sm:$0xff]
                  %491 = vst [vmem:[%s363 + $0x1f8] sm:$0xff] %v490
                  %v492 = vld [vmem:[%s362 + $0x390] sm:$0xff]
                  %493 = vst [vmem:[%s363 + $0x200] sm:$0xff] %v492
                  %v494 = vld [vmem:[%s362 + $0x398] sm:$0xff]
                  %495 = vst [vmem:[%s363 + $0x208] sm:$0xff] %v494
                  %v496 = vld [vmem:[%s362 + $0x3a0] sm:$0xff]
                  %497 = vst [vmem:[%s363 + $0x210] sm:$0xff] %v496
                  %v498 = vld [vmem:[%s362 + $0x3a8] sm:$0xff]
                  %499 = vst [vmem:[%s363 + $0x218] sm:$0xff] %v498
                  %v500 = vld [vmem:[%s362 + $0x3b0] sm:$0xff]
                  %501 = vst [vmem:[%s363 + $0x220] sm:$0xff] %v500
                  %v502 = vld [vmem:[%s362 + $0x3b8] sm:$0xff]
                  %503 = vst [vmem:[%s363 + $0x228] sm:$0xff] %v502
                  %v504 = vld [vmem:[%s362 + $0x3c0] sm:$0xff]
                  %505 = vst [vmem:[%s363 + $0x230] sm:$0xff] %v504
                  %v506 = vld [vmem:[%s362 + $0x3c8] sm:$0xff]
                  %507 = vst [vmem:[%s363 + $0x238] sm:$0xff] %v506
                  %v508 = vld [vmem:[%s362 + $0x3d0] sm:$0xff]
                  %509 = vst [vmem:[%s363 + $0x240] sm:$0xff] %v508
                  %v510 = vld [vmem:[%s362 + $0x3d8] sm:$0xff]
                  %511 = vst [vmem:[%s363 + $0x248] sm:$0xff] %v510
                  %v512 = vld [vmem:[%s362 + $0x3e0] sm:$0xff]
                  %513 = vst [vmem:[%s363 + $0x250] sm:$0xff] %v512
                  %v514 = vld [vmem:[%s362 + $0x4b0] sm:$0xff]
                  %515 = vst [vmem:[%s363 + $0x258] sm:$0xff] %v514
                  %v516 = vld [vmem:[%s362 + $0x4b8] sm:$0xff]
                  %517 = vst [vmem:[%s363 + $0x260] sm:$0xff] %v516
                  %v518 = vld [vmem:[%s362 + $0x4c0] sm:$0xff]
                  %519 = vst [vmem:[%s363 + $0x268] sm:$0xff] %v518
                  %v520 = vld [vmem:[%s362 + $0x4c8] sm:$0xff]
                  %521 = vst [vmem:[%s363 + $0x270] sm:$0xff] %v520
                  %v522 = vld [vmem:[%s362 + $0x4d0] sm:$0xff]
                  %523 = vst [vmem:[%s363 + $0x278] sm:$0xff] %v522
                  %v524 = vld [vmem:[%s362 + $0x4d8] sm:$0xff]
                  %525 = vst [vmem:[%s363 + $0x280] sm:$0xff] %v524
                  %v526 = vld [vmem:[%s362 + $0x4e0] sm:$0xff]
                  %527 = vst [vmem:[%s363 + $0x288] sm:$0xff] %v526
                  %v528 = vld [vmem:[%s362 + $0x4e8] sm:$0xff]
                  %529 = vst [vmem:[%s363 + $0x290] sm:$0xff] %v528
                  %v530 = vld [vmem:[%s362 + $0x4f0] sm:$0xff]
                  %531 = vst [vmem:[%s363 + $0x298] sm:$0xff] %v530
                  %v532 = vld [vmem:[%s362 + $0x4f8] sm:$0xff]
                  %533 = vst [vmem:[%s363 + $0x2a0] sm:$0xff] %v532
                  %v534 = vld [vmem:[%s362 + $0x500] sm:$0xff]
                  %535 = vst [vmem:[%s363 + $0x2a8] sm:$0xff] %v534
                  %v536 = vld [vmem:[%s362 + $0x508] sm:$0xff]
                  %537 = vst [vmem:[%s363 + $0x2b0] sm:$0xff] %v536
                  %v538 = vld [vmem:[%s362 + $0x510] sm:$0xff]
                  %539 = vst [vmem:[%s363 + $0x2b8] sm:$0xff] %v538
                  %v540 = vld [vmem:[%s362 + $0x518] sm:$0xff]
                  %541 = vst [vmem:[%s363 + $0x2c0] sm:$0xff] %v540
                  %v542 = vld [vmem:[%s362 + $0x520] sm:$0xff]
                  %543 = vst [vmem:[%s363 + $0x2c8] sm:$0xff] %v542
                  %v544 = vld [vmem:[%s362 + $0x528] sm:$0xff]
                  %545 = vst [vmem:[%s363 + $0x2d0] sm:$0xff] %v544
                  %v546 = vld [vmem:[%s362 + $0x530] sm:$0xff]
                  %547 = vst [vmem:[%s363 + $0x2d8] sm:$0xff] %v546
                  %v548 = vld [vmem:[%s362 + $0x538] sm:$0xff]
                  %549 = vst [vmem:[%s363 + $0x2e0] sm:$0xff] %v548
                  %v550 = vld [vmem:[%s362 + $0x540] sm:$0xff]
                  %551 = vst [vmem:[%s363 + $0x2e8] sm:$0xff] %v550
                  %v552 = vld [vmem:[%s362 + $0x548] sm:$0xff]
                  %553 = vst [vmem:[%s363 + $0x2f0] sm:$0xff] %v552
                  %v554 = vld [vmem:[%s362 + $0x550] sm:$0xff]
                  %555 = vst [vmem:[%s363 + $0x2f8] sm:$0xff] %v554
                  %v556 = vld [vmem:[%s362 + $0x558] sm:$0xff]
                  %557 = vst [vmem:[%s363 + $0x300] sm:$0xff] %v556
                  %v558 = vld [vmem:[%s362 + $0x560] sm:$0xff]
                  %559 = vst [vmem:[%s363 + $0x308] sm:$0xff] %v558
                  %v560 = vld [vmem:[%s362 + $0x568] sm:$0xff]
                  %561 = vst [vmem:[%s363 + $0x310] sm:$0xff] %v560
                  %v562 = vld [vmem:[%s362 + $0x570] sm:$0xff]
                  %563 = vst [vmem:[%s363 + $0x318] sm:$0xff] %v562
                $region56: #{lenet_forward.3} parent=50 // loop_footer
                  %s361 = sadd.s32 1, %s357
                $region57: #{lenet_forward.3} parent=50 // loop_footer_branch
                  %356 = sbr.rel target = $region53
                $region58: #{lenet_forward.3} parent=50 // loop_exit
                  _
              $region51: #{lenet_forward.3} parent=35 // pred_fallthru
                _
              // Predicated region
              $region59: #{lenet_forward.3} parent=35 // pred_check
                _
              $region60: #{lenet_forward.3} parent=35 // pred_check_branch
                %565 = sbr.rel target = $region62
              $region61: #{lenet_forward.3} parent=35 // pred_region
                _
              $region62: #{lenet_forward.3} parent=35 // pred_fallthru
                _
            $region36: #{lenet_forward.3} parent=31 // pred_fallthru
              _
            // Predicated region
            $region37: #{lenet_forward.3} parent=31 // pred_check
              _
            $region38: #{lenet_forward.3} parent=31 // pred_check_branch
              %143 = sbr.rel target = $region40
            $region39: #{lenet_forward.3} parent=31 // pred_region
              %s145 = ssub.s32 256, 1
              loop: start=0, step=1, limit=1
              $region41: #{lenet_forward.3} parent=39 // loop_pre_header
                _
              $region42: #{lenet_forward.3} parent=39 // loop_header
                %s147 = sphi 0, %s151
                %p148 = scmp.ge.s32.totalorder %s147, 1
                %s152 = sphi %s137, %s137
                %s153 = sphi %s134, %s134
              $region43: #{lenet_forward.3} parent=39 // loop_header_branch
                %150 = sbr.rel (%p148) target = $region47
              $region44: #{lenet_forward.3} parent=39 // loop_body
                %v154 = vld [vmem:[%s152] sm:%s145]
                %155 = vst [vmem:[%s153] sm:%s145] %v154
                %v156 = vld [vmem:[%s152 + $0x8] sm:%s145]
                %157 = vst [vmem:[%s153 + $0x8] sm:%s145] %v156
                %v158 = vld [vmem:[%s152 + $0x10] sm:%s145]
                %159 = vst [vmem:[%s153 + $0x10] sm:%s145] %v158
                %v160 = vld [vmem:[%s152 + $0x18] sm:%s145]
                %161 = vst [vmem:[%s153 + $0x18] sm:%s145] %v160
                %v162 = vld [vmem:[%s152 + $0x20] sm:%s145]
                %163 = vst [vmem:[%s153 + $0x20] sm:%s145] %v162
                %v164 = vld [vmem:[%s152 + $0x28] sm:%s145]
                %165 = vst [vmem:[%s153 + $0x28] sm:%s145] %v164
                %v166 = vld [vmem:[%s152 + $0x30] sm:%s145]
                %167 = vst [vmem:[%s153 + $0x30] sm:%s145] %v166
                %v168 = vld [vmem:[%s152 + $0x38] sm:%s145]
                %169 = vst [vmem:[%s153 + $0x38] sm:%s145] %v168
                %v170 = vld [vmem:[%s152 + $0x40] sm:%s145]
                %171 = vst [vmem:[%s153 + $0x40] sm:%s145] %v170
                %v172 = vld [vmem:[%s152 + $0x48] sm:%s145]
                %173 = vst [vmem:[%s153 + $0x48] sm:%s145] %v172
                %v174 = vld [vmem:[%s152 + $0x50] sm:%s145]
                %175 = vst [vmem:[%s153 + $0x50] sm:%s145] %v174
                %v176 = vld [vmem:[%s152 + $0x58] sm:%s145]
                %177 = vst [vmem:[%s153 + $0x58] sm:%s145] %v176
                %v178 = vld [vmem:[%s152 + $0x60] sm:%s145]
                %179 = vst [vmem:[%s153 + $0x60] sm:%s145] %v178
                %v180 = vld [vmem:[%s152 + $0x68] sm:%s145]
                %181 = vst [vmem:[%s153 + $0x68] sm:%s145] %v180
                %v182 = vld [vmem:[%s152 + $0x70] sm:%s145]
                %183 = vst [vmem:[%s153 + $0x70] sm:%s145] %v182
                %v184 = vld [vmem:[%s152 + $0x78] sm:%s145]
                %185 = vst [vmem:[%s153 + $0x78] sm:%s145] %v184
                %v186 = vld [vmem:[%s152 + $0x80] sm:%s145]
                %187 = vst [vmem:[%s153 + $0x80] sm:%s145] %v186
                %v188 = vld [vmem:[%s152 + $0x88] sm:%s145]
                %189 = vst [vmem:[%s153 + $0x88] sm:%s145] %v188
                %v190 = vld [vmem:[%s152 + $0x90] sm:%s145]
                %191 = vst [vmem:[%s153 + $0x90] sm:%s145] %v190
                %v192 = vld [vmem:[%s152 + $0x98] sm:%s145]
                %193 = vst [vmem:[%s153 + $0x98] sm:%s145] %v192
                %v194 = vld [vmem:[%s152 + $0xa0] sm:%s145]
                %195 = vst [vmem:[%s153 + $0xa0] sm:%s145] %v194
                %v196 = vld [vmem:[%s152 + $0xa8] sm:%s145]
                %197 = vst [vmem:[%s153 + $0xa8] sm:%s145] %v196
                %v198 = vld [vmem:[%s152 + $0xb0] sm:%s145]
                %199 = vst [vmem:[%s153 + $0xb0] sm:%s145] %v198
                %v200 = vld [vmem:[%s152 + $0xb8] sm:%s145]
                %201 = vst [vmem:[%s153 + $0xb8] sm:%s145] %v200
                %v202 = vld [vmem:[%s152 + $0xc0] sm:%s145]
                %203 = vst [vmem:[%s153 + $0xc0] sm:%s145] %v202
                %v204 = vld [vmem:[%s152 + $0x190] sm:%s145]
                %205 = vst [vmem:[%s153 + $0xc8] sm:%s145] %v204
                %v206 = vld [vmem:[%s152 + $0x198] sm:%s145]
                %207 = vst [vmem:[%s153 + $0xd0] sm:%s145] %v206
                %v208 = vld [vmem:[%s152 + $0x1a0] sm:%s145]
                %209 = vst [vmem:[%s153 + $0xd8] sm:%s145] %v208
                %v210 = vld [vmem:[%s152 + $0x1a8] sm:%s145]
                %211 = vst [vmem:[%s153 + $0xe0] sm:%s145] %v210
                %v212 = vld [vmem:[%s152 + $0x1b0] sm:%s145]
                %213 = vst [vmem:[%s153 + $0xe8] sm:%s145] %v212
                %v214 = vld [vmem:[%s152 + $0x1b8] sm:%s145]
                %215 = vst [vmem:[%s153 + $0xf0] sm:%s145] %v214
                %v216 = vld [vmem:[%s152 + $0x1c0] sm:%s145]
                %217 = vst [vmem:[%s153 + $0xf8] sm:%s145] %v216
                %v218 = vld [vmem:[%s152 + $0x1c8] sm:%s145]
                %219 = vst [vmem:[%s153 + $0x100] sm:%s145] %v218
                %v220 = vld [vmem:[%s152 + $0x1d0] sm:%s145]
                %221 = vst [vmem:[%s153 + $0x108] sm:%s145] %v220
                %v222 = vld [vmem:[%s152 + $0x1d8] sm:%s145]
                %223 = vst [vmem:[%s153 + $0x110] sm:%s145] %v222
                %v224 = vld [vmem:[%s152 + $0x1e0] sm:%s145]
                %225 = vst [vmem:[%s153 + $0x118] sm:%s145] %v224
                %v226 = vld [vmem:[%s152 + $0x1e8] sm:%s145]
                %227 = vst [vmem:[%s153 + $0x120] sm:%s145] %v226
                %v228 = vld [vmem:[%s152 + $0x1f0] sm:%s145]
                %229 = vst [vmem:[%s153 + $0x128] sm:%s145] %v228
                %v230 = vld [vmem:[%s152 + $0x1f8] sm:%s145]
                %231 = vst [vmem:[%s153 + $0x130] sm:%s145] %v230
                %v232 = vld [vmem:[%s152 + $0x200] sm:%s145]
                %233 = vst [vmem:[%s153 + $0x138] sm:%s145] %v232
                %v234 = vld [vmem:[%s152 + $0x208] sm:%s145]
                %235 = vst [vmem:[%s153 + $0x140] sm:%s145] %v234
                %v236 = vld [vmem:[%s152 + $0x210] sm:%s145]
                %237 = vst [vmem:[%s153 + $0x148] sm:%s145] %v236
                %v238 = vld [vmem:[%s152 + $0x218] sm:%s145]
                %239 = vst [vmem:[%s153 + $0x150] sm:%s145] %v238
                %v240 = vld [vmem:[%s152 + $0x220] sm:%s145]
                %241 = vst [vmem:[%s153 + $0x158] sm:%s145] %v240
                %v242 = vld [vmem:[%s152 + $0x228] sm:%s145]
                %243 = vst [vmem:[%s153 + $0x160] sm:%s145] %v242
                %v244 = vld [vmem:[%s152 + $0x230] sm:%s145]
                %245 = vst [vmem:[%s153 + $0x168] sm:%s145] %v244
                %v246 = vld [vmem:[%s152 + $0x238] sm:%s145]
                %247 = vst [vmem:[%s153 + $0x170] sm:%s145] %v246
                %v248 = vld [vmem:[%s152 + $0x240] sm:%s145]
                %249 = vst [vmem:[%s153 + $0x178] sm:%s145] %v248
                %v250 = vld [vmem:[%s152 + $0x248] sm:%s145]
                %251 = vst [vmem:[%s153 + $0x180] sm:%s145] %v250
                %v252 = vld [vmem:[%s152 + $0x250] sm:%s145]
                %253 = vst [vmem:[%s153 + $0x188] sm:%s145] %v252
                %v254 = vld [vmem:[%s152 + $0x320] sm:%s145]
                %255 = vst [vmem:[%s153 + $0x190] sm:%s145] %v254
                %v256 = vld [vmem:[%s152 + $0x328] sm:%s145]
                %257 = vst [vmem:[%s153 + $0x198] sm:%s145] %v256
                %v258 = vld [vmem:[%s152 + $0x330] sm:%s145]
                %259 = vst [vmem:[%s153 + $0x1a0] sm:%s145] %v258
                %v260 = vld [vmem:[%s152 + $0x338] sm:%s145]
                %261 = vst [vmem:[%s153 + $0x1a8] sm:%s145] %v260
                %v262 = vld [vmem:[%s152 + $0x340] sm:%s145]
                %263 = vst [vmem:[%s153 + $0x1b0] sm:%s145] %v262
                %v264 = vld [vmem:[%s152 + $0x348] sm:%s145]
                %265 = vst [vmem:[%s153 + $0x1b8] sm:%s145] %v264
                %v266 = vld [vmem:[%s152 + $0x350] sm:%s145]
                %267 = vst [vmem:[%s153 + $0x1c0] sm:%s145] %v266
                %v268 = vld [vmem:[%s152 + $0x358] sm:%s145]
                %269 = vst [vmem:[%s153 + $0x1c8] sm:%s145] %v268
                %v270 = vld [vmem:[%s152 + $0x360] sm:%s145]
                %271 = vst [vmem:[%s153 + $0x1d0] sm:%s145] %v270
                %v272 = vld [vmem:[%s152 + $0x368] sm:%s145]
                %273 = vst [vmem:[%s153 + $0x1d8] sm:%s145] %v272
                %v274 = vld [vmem:[%s152 + $0x370] sm:%s145]
                %275 = vst [vmem:[%s153 + $0x1e0] sm:%s145] %v274
                %v276 = vld [vmem:[%s152 + $0x378] sm:%s145]
                %277 = vst [vmem:[%s153 + $0x1e8] sm:%s145] %v276
                %v278 = vld [vmem:[%s152 + $0x380] sm:%s145]
                %279 = vst [vmem:[%s153 + $0x1f0] sm:%s145] %v278
                %v280 = vld [vmem:[%s152 + $0x388] sm:%s145]
                %281 = vst [vmem:[%s153 + $0x1f8] sm:%s145] %v280
                %v282 = vld [vmem:[%s152 + $0x390] sm:%s145]
                %283 = vst [vmem:[%s153 + $0x200] sm:%s145] %v282
                %v284 = vld [vmem:[%s152 + $0x398] sm:%s145]
                %285 = vst [vmem:[%s153 + $0x208] sm:%s145] %v284
                %v286 = vld [vmem:[%s152 + $0x3a0] sm:%s145]
                %287 = vst [vmem:[%s153 + $0x210] sm:%s145] %v286
                %v288 = vld [vmem:[%s152 + $0x3a8] sm:%s145]
                %289 = vst [vmem:[%s153 + $0x218] sm:%s145] %v288
                %v290 = vld [vmem:[%s152 + $0x3b0] sm:%s145]
                %291 = vst [vmem:[%s153 + $0x220] sm:%s145] %v290
                %v292 = vld [vmem:[%s152 + $0x3b8] sm:%s145]
                %293 = vst [vmem:[%s153 + $0x228] sm:%s145] %v292
                %v294 = vld [vmem:[%s152 + $0x3c0] sm:%s145]
                %295 = vst [vmem:[%s153 + $0x230] sm:%s145] %v294
                %v296 = vld [vmem:[%s152 + $0x3c8] sm:%s145]
                %297 = vst [vmem:[%s153 + $0x238] sm:%s145] %v296
                %v298 = vld [vmem:[%s152 + $0x3d0] sm:%s145]
                %299 = vst [vmem:[%s153 + $0x240] sm:%s145] %v298
                %v300 = vld [vmem:[%s152 + $0x3d8] sm:%s145]
                %301 = vst [vmem:[%s153 + $0x248] sm:%s145] %v300
                %v302 = vld [vmem:[%s152 + $0x3e0] sm:%s145]
                %303 = vst [vmem:[%s153 + $0x250] sm:%s145] %v302
                %v304 = vld [vmem:[%s152 + $0x4b0] sm:%s145]
                %305 = vst [vmem:[%s153 + $0x258] sm:%s145] %v304
                %v306 = vld [vmem:[%s152 + $0x4b8] sm:%s145]
                %307 = vst [vmem:[%s153 + $0x260] sm:%s145] %v306
                %v308 = vld [vmem:[%s152 + $0x4c0] sm:%s145]
                %309 = vst [vmem:[%s153 + $0x268] sm:%s145] %v308
                %v310 = vld [vmem:[%s152 + $0x4c8] sm:%s145]
                %311 = vst [vmem:[%s153 + $0x270] sm:%s145] %v310
                %v312 = vld [vmem:[%s152 + $0x4d0] sm:%s145]
                %313 = vst [vmem:[%s153 + $0x278] sm:%s145] %v312
                %v314 = vld [vmem:[%s152 + $0x4d8] sm:%s145]
                %315 = vst [vmem:[%s153 + $0x280] sm:%s145] %v314
                %v316 = vld [vmem:[%s152 + $0x4e0] sm:%s145]
                %317 = vst [vmem:[%s153 + $0x288] sm:%s145] %v316
                %v318 = vld [vmem:[%s152 + $0x4e8] sm:%s145]
                %319 = vst [vmem:[%s153 + $0x290] sm:%s145] %v318
                %v320 = vld [vmem:[%s152 + $0x4f0] sm:%s145]
                %321 = vst [vmem:[%s153 + $0x298] sm:%s145] %v320
                %v322 = vld [vmem:[%s152 + $0x4f8] sm:%s145]
                %323 = vst [vmem:[%s153 + $0x2a0] sm:%s145] %v322
                %v324 = vld [vmem:[%s152 + $0x500] sm:%s145]
                %325 = vst [vmem:[%s153 + $0x2a8] sm:%s145] %v324
                %v326 = vld [vmem:[%s152 + $0x508] sm:%s145]
                %327 = vst [vmem:[%s153 + $0x2b0] sm:%s145] %v326
                %v328 = vld [vmem:[%s152 + $0x510] sm:%s145]
                %329 = vst [vmem:[%s153 + $0x2b8] sm:%s145] %v328
                %v330 = vld [vmem:[%s152 + $0x518] sm:%s145]
                %331 = vst [vmem:[%s153 + $0x2c0] sm:%s145] %v330
                %v332 = vld [vmem:[%s152 + $0x520] sm:%s145]
                %333 = vst [vmem:[%s153 + $0x2c8] sm:%s145] %v332
                %v334 = vld [vmem:[%s152 + $0x528] sm:%s145]
                %335 = vst [vmem:[%s153 + $0x2d0] sm:%s145] %v334
                %v336 = vld [vmem:[%s152 + $0x530] sm:%s145]
                %337 = vst [vmem:[%s153 + $0x2d8] sm:%s145] %v336
                %v338 = vld [vmem:[%s152 + $0x538] sm:%s145]
                %339 = vst [vmem:[%s153 + $0x2e0] sm:%s145] %v338
                %v340 = vld [vmem:[%s152 + $0x540] sm:%s145]
                %341 = vst [vmem:[%s153 + $0x2e8] sm:%s145] %v340
                %v342 = vld [vmem:[%s152 + $0x548] sm:%s145]
                %343 = vst [vmem:[%s153 + $0x2f0] sm:%s145] %v342
                %v344 = vld [vmem:[%s152 + $0x550] sm:%s145]
                %345 = vst [vmem:[%s153 + $0x2f8] sm:%s145] %v344
                %v346 = vld [vmem:[%s152 + $0x558] sm:%s145]
                %347 = vst [vmem:[%s153 + $0x300] sm:%s145] %v346
                %v348 = vld [vmem:[%s152 + $0x560] sm:%s145]
                %349 = vst [vmem:[%s153 + $0x308] sm:%s145] %v348
                %v350 = vld [vmem:[%s152 + $0x568] sm:%s145]
                %351 = vst [vmem:[%s153 + $0x310] sm:%s145] %v350
                %v352 = vld [vmem:[%s152 + $0x570] sm:%s145]
                %353 = vst [vmem:[%s153 + $0x318] sm:%s145] %v352
              $region45: #{lenet_forward.3} parent=39 // loop_footer
                %s151 = sadd.s32 1, %s147
              $region46: #{lenet_forward.3} parent=39 // loop_footer_branch
                %146 = sbr.rel target = $region42
              $region47: #{lenet_forward.3} parent=39 // loop_exit
                _
            $region40: #{lenet_forward.3} parent=31 // pred_fallthru
              _
          $region32: #{lenet_forward.3} parent=27 // pred_fallthru
            _
          %566 = vnop
        $region28: #{lenet_forward.3} parent=23 // pred_fallthru
          _
      $region24: #{lenet_forward.3} parent=5 // pred_fallthru
        _
      %p567 = scmp.le.s32.totalorder 1, %s9
      %p568 = scmp.lt.s32.totalorder %s9, 3
      %p569 = pnand %p567, %p568
      %p570 = pneg %p569
      // Predicated region
      $region63: #{lenet_forward.3} parent=5 // pred_check
        _
      $region64: #{lenet_forward.3} parent=5 // pred_check_branch
        %572 = sbr.rel (%p569) target = $region66
      $region65: #{lenet_forward.3} parent=5 // pred_region
        %s573 = ssub.s32 %s9, 1
        %s574 = sand.u32 %s22, 1
        %s575 = sand.u32 %s22, 1
        %s576 = smul.addr %s575, 800
        %s577 = scalar_lea.vmem [#allocation2], %s576
        // Predicated region
        $region67: #{lenet_forward.3} parent=65 // pred_check
          %p578 = pneg %p35
        $region68: #{lenet_forward.3} parent=65 // pred_check_branch
          %580 = sbr.rel (%p578) target = $region70
        $region69: #{lenet_forward.3} parent=65 // pred_region
          _
        $region70: #{lenet_forward.3} parent=65 // pred_fallthru
          _
        %s581 = sand.u32 %s22, 1
        %s582 = sand.u32 %s22, 1
        %s583 = smul.addr %s582, 800
        %s584 = scalar_lea.vmem [#allocation2], %s583
        %p585 = pneg %p35
        %p586 = pneg %p32
        %p587 = pneg %p56
        %p588 = pneg %p53
        %p589 = pneg %p77
        %p590 = pneg %p74
        %p591 = pneg %p103
        %p592 = pneg %p100
        %s593 = smul.u32 25, %s14
        %p594 = scmp.lt.s32.totalorder %s593, 49
        %s595 = scalar_select %p594, %s593, 49
        %s596 = smul.addr %s595, 8
        %s597 = scalar_lea.vmem %s3, %s596
        %s598 = smul.u32 25, %s14
        %s599 = smul.u32 25, %s14
        %p600 = scmp.lt.s32.totalorder %s599, 49
        %s601 = scalar_select %p600, %s599, 49
        %s602 = smul.addr %s601, 8
        %s603 = scalar_lea.vmem %s3, %s602
        %s604 = smul.u32 25, %s14
        %v605 = vld [vmem:[%s577] sm:$0xff]
        %v606 = vld [vmem:[%s577 + $0x8] sm:$0xff]
        %v607 = vld [vmem:[%s577 + $0x10] sm:$0xff]
        %v608 = vld [vmem:[%s577 + $0x18] sm:$0xff]
        %v609 = vld [vmem:[%s577 + $0x20] sm:$0xff]
        %v610 = vld [vmem:[%s577 + $0x28] sm:$0xff]
        %v611 = vld [vmem:[%s577 + $0x30] sm:$0xff]
        %v612 = vld [vmem:[%s577 + $0x38] sm:$0xff]
        %v613 = vld [vmem:[%s577 + $0x40] sm:$0xff]
        %v614 = vld [vmem:[%s577 + $0x48] sm:$0xff]
        %v615 = vld [vmem:[%s577 + $0x50] sm:$0xff]
        %v616 = vld [vmem:[%s577 + $0x58] sm:$0xff]
        %v617 = vld [vmem:[%s577 + $0x60] sm:$0xff]
        %v618 = vld [vmem:[%s577 + $0x68] sm:$0xff]
        %v619 = vld [vmem:[%s577 + $0x70] sm:$0xff]
        %v620 = vld [vmem:[%s577 + $0x78] sm:$0xff]
        %v621 = vld [vmem:[%s577 + $0x80] sm:$0xff]
        %v622 = vld [vmem:[%s577 + $0x88] sm:$0xff]
        %v623 = vld [vmem:[%s577 + $0x90] sm:$0xff]
        %v624 = vld [vmem:[%s577 + $0x98] sm:$0xff]
        %v625 = vld [vmem:[%s577 + $0xa0] sm:$0xff]
        %v626 = vld [vmem:[%s577 + $0xa8] sm:$0xff]
        %v627 = vld [vmem:[%s577 + $0xb0] sm:$0xff]
        %v628 = vld [vmem:[%s577 + $0xb8] sm:$0xff]
        %v629 = vld [vmem:[%s577 + $0xc0] sm:$0xff]
        %v630 = vld [vmem:[%s577 + $0xc8] sm:$0xff]
        %v631 = vld [vmem:[%s577 + $0xd0] sm:$0xff]
        %v632 = vld [vmem:[%s577 + $0xd8] sm:$0xff]
        %v633 = vld [vmem:[%s577 + $0xe0] sm:$0xff]
        %v634 = vld [vmem:[%s577 + $0xe8] sm:$0xff]
        %v635 = vld [vmem:[%s577 + $0xf0] sm:$0xff]
        %v636 = vld [vmem:[%s577 + $0xf8] sm:$0xff]
        %v637 = vld [vmem:[%s577 + $0x100] sm:$0xff]
        %v638 = vld [vmem:[%s577 + $0x108] sm:$0xff]
        %v639 = vld [vmem:[%s577 + $0x110] sm:$0xff]
        %v640 = vld [vmem:[%s577 + $0x118] sm:$0xff]
        %v641 = vld [vmem:[%s577 + $0x120] sm:$0xff]
        %v642 = vld [vmem:[%s577 + $0x128] sm:$0xff]
        %v643 = vld [vmem:[%s577 + $0x130] sm:$0xff]
        %v644 = vld [vmem:[%s577 + $0x138] sm:$0xff]
        %v645 = vld [vmem:[%s577 + $0x140] sm:$0xff]
        %v646 = vld [vmem:[%s577 + $0x148] sm:$0xff]
        %v647 = vld [vmem:[%s577 + $0x150] sm:$0xff]
        %v648 = vld [vmem:[%s577 + $0x158] sm:$0xff]
        %v649 = vld [vmem:[%s577 + $0x160] sm:$0xff]
        %v650 = vld [vmem:[%s577 + $0x168] sm:$0xff]
        %v651 = vld [vmem:[%s577 + $0x170] sm:$0xff]
        %v652 = vld [vmem:[%s577 + $0x178] sm:$0xff]
        %v653 = vld [vmem:[%s577 + $0x180] sm:$0xff]
        %v654 = vld [vmem:[%s577 + $0x188] sm:$0xff]
        %v655 = vld [vmem:[%s577 + $0x190] sm:$0xff]
        %v656 = vld [vmem:[%s577 + $0x198] sm:$0xff]
        %v657 = vld [vmem:[%s577 + $0x1a0] sm:$0xff]
        %v658 = vld [vmem:[%s577 + $0x1a8] sm:$0xff]
        %v659 = vld [vmem:[%s577 + $0x1b0] sm:$0xff]
        %v660 = vld [vmem:[%s577 + $0x1b8] sm:$0xff]
        %v661 = vld [vmem:[%s577 + $0x1c0] sm:$0xff]
        %v662 = vld [vmem:[%s577 + $0x1c8] sm:$0xff]
        %v663 = vld [vmem:[%s577 + $0x1d0] sm:$0xff]
        %v664 = vld [vmem:[%s577 + $0x1d8] sm:$0xff]
        %v665 = vld [vmem:[%s577 + $0x1e0] sm:$0xff]
        %v666 = vld [vmem:[%s577 + $0x1e8] sm:$0xff]
        %v667 = vld [vmem:[%s577 + $0x1f0] sm:$0xff]
        %v668 = vld [vmem:[%s577 + $0x1f8] sm:$0xff]
        %v669 = vld [vmem:[%s577 + $0x200] sm:$0xff]
        %v670 = vld [vmem:[%s577 + $0x208] sm:$0xff]
        %v671 = vld [vmem:[%s577 + $0x210] sm:$0xff]
        %v672 = vld [vmem:[%s577 + $0x218] sm:$0xff]
        %v673 = vld [vmem:[%s577 + $0x220] sm:$0xff]
        %v674 = vld [vmem:[%s577 + $0x228] sm:$0xff]
        %v675 = vld [vmem:[%s577 + $0x230] sm:$0xff]
        %v676 = vld [vmem:[%s577 + $0x238] sm:$0xff]
        %v677 = vld [vmem:[%s577 + $0x240] sm:$0xff]
        %v678 = vld [vmem:[%s577 + $0x248] sm:$0xff]
        %v679 = vld [vmem:[%s577 + $0x250] sm:$0xff]
        %v680 = vld [vmem:[%s577 + $0x258] sm:$0xff]
        %v681 = vld [vmem:[%s577 + $0x260] sm:$0xff]
        %v682 = vld [vmem:[%s577 + $0x268] sm:$0xff]
        %v683 = vld [vmem:[%s577 + $0x270] sm:$0xff]
        %v684 = vld [vmem:[%s577 + $0x278] sm:$0xff]
        %v685 = vld [vmem:[%s577 + $0x280] sm:$0xff]
        %v686 = vld [vmem:[%s577 + $0x288] sm:$0xff]
        %v687 = vld [vmem:[%s577 + $0x290] sm:$0xff]
        %v688 = vld [vmem:[%s577 + $0x298] sm:$0xff]
        %v689 = vld [vmem:[%s577 + $0x2a0] sm:$0xff]
        %v690 = vld [vmem:[%s577 + $0x2a8] sm:$0xff]
        %v691 = vld [vmem:[%s577 + $0x2b0] sm:$0xff]
        %v692 = vld [vmem:[%s577 + $0x2b8] sm:$0xff]
        %v693 = vld [vmem:[%s577 + $0x2c0] sm:$0xff]
        %v694 = vld [vmem:[%s577 + $0x2c8] sm:$0xff]
        %v695 = vld [vmem:[%s577 + $0x2d0] sm:$0xff]
        %v696 = vld [vmem:[%s577 + $0x2d8] sm:$0xff]
        %v697 = vld [vmem:[%s577 + $0x2e0] sm:$0xff]
        %v698 = vld [vmem:[%s577 + $0x2e8] sm:$0xff]
        %v699 = vld [vmem:[%s577 + $0x2f0] sm:$0xff]
        %v700 = vld [vmem:[%s577 + $0x2f8] sm:$0xff]
        %v701 = vld [vmem:[%s577 + $0x300] sm:$0xff]
        %v702 = vld [vmem:[%s577 + $0x308] sm:$0xff]
        %v703 = vld [vmem:[%s577 + $0x310] sm:$0xff]
        %v704 = vld [vmem:[%s577 + $0x318] sm:$0xff]
        %v705 = vld [vmem:[%s1] sm:$0xff]
        %v706 = vld [vmem:[%s1 + $0x8] sm:$0xff]
        %v707 = vld [vmem:[%s1 + $0x10] sm:$0xff]
        %v708 = vld [vmem:[%s1 + $0x18] sm:$0xff]
        %vm709 = vcmask 261120
        %v711 = vsel %vm709, %v605, 0
        %v714 = vsel %vm709, %v606, 0
        %v717 = vsel %vm709, %v607, 0
        %v720 = vsel %vm709, %v608, 0
        %v723 = vsel %vm709, %v609, 0
        %v726 = vsel %vm709, %v610, 0
        %v729 = vsel %vm709, %v611, 0
        %v732 = vsel %vm709, %v612, 0
        %v735 = vsel %vm709, %v613, 0
        %v738 = vsel %vm709, %v614, 0
        %v741 = vsel %vm709, %v615, 0
        %v744 = vsel %vm709, %v616, 0
        %v747 = vsel %vm709, %v617, 0
        %v750 = vsel %vm709, %v618, 0
        %v753 = vsel %vm709, %v619, 0
        %v756 = vsel %vm709, %v620, 0
        %v759 = vsel %vm709, %v621, 0
        %v762 = vsel %vm709, %v622, 0
        %v765 = vsel %vm709, %v623, 0
        %v768 = vsel %vm709, %v624, 0
        %v771 = vsel %vm709, %v625, 0
        %v774 = vsel %vm709, %v626, 0
        %v777 = vsel %vm709, %v627, 0
        %v780 = vsel %vm709, %v628, 0
        %v783 = vsel %vm709, %v629, 0
        %v786 = vsel %vm709, %v630, 0
        %v789 = vsel %vm709, %v631, 0
        %v792 = vsel %vm709, %v632, 0
        %v795 = vsel %vm709, %v633, 0
        %v798 = vsel %vm709, %v634, 0
        %v801 = vsel %vm709, %v635, 0
        %v804 = vsel %vm709, %v636, 0
        %v807 = vsel %vm709, %v637, 0
        %v810 = vsel %vm709, %v638, 0
        %v813 = vsel %vm709, %v639, 0
        %v816 = vsel %vm709, %v640, 0
        %v819 = vsel %vm709, %v641, 0
        %v822 = vsel %vm709, %v642, 0
        %v825 = vsel %vm709, %v643, 0
        %v828 = vsel %vm709, %v644, 0
        %v831 = vsel %vm709, %v645, 0
        %v834 = vsel %vm709, %v646, 0
        %v837 = vsel %vm709, %v647, 0
        %v840 = vsel %vm709, %v648, 0
        %v843 = vsel %vm709, %v649, 0
        %v846 = vsel %vm709, %v650, 0
        %v849 = vsel %vm709, %v651, 0
        %v852 = vsel %vm709, %v652, 0
        %v855 = vsel %vm709, %v653, 0
        %v858 = vsel %vm709, %v654, 0
        %v861 = vsel %vm709, %v655, 0
        %v864 = vsel %vm709, %v656, 0
        %v867 = vsel %vm709, %v657, 0
        %v870 = vsel %vm709, %v658, 0
        %v873 = vsel %vm709, %v659, 0
        %v876 = vsel %vm709, %v660, 0
        %v879 = vsel %vm709, %v661, 0
        %v882 = vsel %vm709, %v662, 0
        %v885 = vsel %vm709, %v663, 0
        %v888 = vsel %vm709, %v664, 0
        %v891 = vsel %vm709, %v665, 0
        %v894 = vsel %vm709, %v666, 0
        %v897 = vsel %vm709, %v667, 0
        %v900 = vsel %vm709, %v668, 0
        %v903 = vsel %vm709, %v669, 0
        %v906 = vsel %vm709, %v670, 0
        %v909 = vsel %vm709, %v671, 0
        %v912 = vsel %vm709, %v672, 0
        %v915 = vsel %vm709, %v673, 0
        %v918 = vsel %vm709, %v674, 0
        %v921 = vsel %vm709, %v675, 0
        %v924 = vsel %vm709, %v676, 0
        %v927 = vsel %vm709, %v677, 0
        %v930 = vsel %vm709, %v678, 0
        %v933 = vsel %vm709, %v679, 0
        %v936 = vsel %vm709, %v680, 0
        %v939 = vsel %vm709, %v681, 0
        %v942 = vsel %vm709, %v682, 0
        %v945 = vsel %vm709, %v683, 0
        %v948 = vsel %vm709, %v684, 0
        %v951 = vsel %vm709, %v685, 0
        %v954 = vsel %vm709, %v686, 0
        %v957 = vsel %vm709, %v687, 0
        %v960 = vsel %vm709, %v688, 0
        %v963 = vsel %vm709, %v689, 0
        %v966 = vsel %vm709, %v690, 0
        %v969 = vsel %vm709, %v691, 0
        %v972 = vsel %vm709, %v692, 0
        %v975 = vsel %vm709, %v693, 0
        %v978 = vsel %vm709, %v694, 0
        %v981 = vsel %vm709, %v695, 0
        %v984 = vsel %vm709, %v696, 0
        %v987 = vsel %vm709, %v697, 0
        %v990 = vsel %vm709, %v698, 0
        %v993 = vsel %vm709, %v699, 0
        %v996 = vsel %vm709, %v700, 0
        %v999 = vsel %vm709, %v701, 0
        %v1002 = vsel %vm709, %v702, 0
        %v1005 = vsel %vm709, %v703, 0
        %v1008 = vsel %vm709, %v704, 0
        %1010 = vmatpush.msra.mxu0 0.0
        %1011 = vmatpush.msra.mxu0 0.0
        %1012 = vmatpush.msra.mxu0 0.0
        %1013 = vmatpush.msra.mxu0 0.0
        %1014 = vmatpush.msra.mxu0 0.0
        %1015 = vmatpush.msra.mxu0 0.0
        %1016 = vmatpush.msra.mxu0 0.0
        %1017 = vmatpush.msra.mxu0 0.0
        %1018 = vmatpush.msra.mxu0 0.0
        %1019 = vmatpush.msra.mxu0 0.0
        %1020 = vmatpush.msra.mxu0 0.0
        %1021 = vmatpush.msra.mxu0 0.0
        %1022 = vmatpush.msra.mxu0 %v708
        %1023 = vmatpush.msra.mxu0 %v707
        %1024 = vmatpush.msra.mxu0 %v706
        %1025 = vmatpush.msra.mxu0 %v705
        %1026 = vmatmul.f32.gmra.mxu0 %v711
        %v1027 = vpop.f32.mrf.mxu0
        %v1028 = vadd.f32 0.0, %v1027
        %1029 = vmatmul.f32.gmra.mxu0 %v714
        %v1030 = vpop.f32.mrf.mxu0
        %v1031 = vadd.f32 0.0, %v1030
        %1032 = vmatmul.f32.gmra.mxu0 %v717
        %v1033 = vpop.f32.mrf.mxu0
        %v1034 = vadd.f32 0.0, %v1033
        %1035 = vmatmul.f32.gmra.mxu0 %v720
        %v1036 = vpop.f32.mrf.mxu0
        %v1037 = vadd.f32 0.0, %v1036
        %1038 = vmatmul.f32.gmra.mxu0 %v723
        %v1039 = vpop.f32.mrf.mxu0
        %v1040 = vadd.f32 0.0, %v1039
        %1041 = vmatmul.f32.gmra.mxu0 %v726
        %v1042 = vpop.f32.mrf.mxu0
        %v1043 = vadd.f32 0.0, %v1042
        %1044 = vmatmul.f32.gmra.mxu0 %v729
        %v1045 = vpop.f32.mrf.mxu0
        %v1046 = vadd.f32 0.0, %v1045
        %1047 = vmatmul.f32.gmra.mxu0 %v732
        %v1048 = vpop.f32.mrf.mxu0
        %v1049 = vadd.f32 0.0, %v1048
        %1050 = vmatmul.f32.gmra.mxu0 %v735
        %v1051 = vpop.f32.mrf.mxu0
        %v1052 = vadd.f32 0.0, %v1051
        %1053 = vmatmul.f32.gmra.mxu0 %v738
        %v1054 = vpop.f32.mrf.mxu0
        %v1055 = vadd.f32 0.0, %v1054
        %1056 = vmatmul.f32.gmra.mxu0 %v741
        %v1057 = vpop.f32.mrf.mxu0
        %v1058 = vadd.f32 0.0, %v1057
        %1059 = vmatmul.f32.gmra.mxu0 %v744
        %v1060 = vpop.f32.mrf.mxu0
        %v1061 = vadd.f32 0.0, %v1060
        %1062 = vmatmul.f32.gmra.mxu0 %v747
        %v1063 = vpop.f32.mrf.mxu0
        %v1064 = vadd.f32 0.0, %v1063
        %1065 = vmatmul.f32.gmra.mxu0 %v750
        %v1066 = vpop.f32.mrf.mxu0
        %v1067 = vadd.f32 0.0, %v1066
        %1068 = vmatmul.f32.gmra.mxu0 %v753
        %v1069 = vpop.f32.mrf.mxu0
        %v1070 = vadd.f32 0.0, %v1069
        %1071 = vmatmul.f32.gmra.mxu0 %v756
        %v1072 = vpop.f32.mrf.mxu0
        %v1073 = vadd.f32 0.0, %v1072
        %1074 = vmatmul.f32.gmra.mxu0 %v759
        %v1075 = vpop.f32.mrf.mxu0
        %v1076 = vadd.f32 0.0, %v1075
        %1077 = vmatmul.f32.gmra.mxu0 %v762
        %v1078 = vpop.f32.mrf.mxu0
        %v1079 = vadd.f32 0.0, %v1078
        %1080 = vmatmul.f32.gmra.mxu0 %v765
        %v1081 = vpop.f32.mrf.mxu0
        %v1082 = vadd.f32 0.0, %v1081
        %1083 = vmatmul.f32.gmra.mxu0 %v768
        %v1084 = vpop.f32.mrf.mxu0
        %v1085 = vadd.f32 0.0, %v1084
        %1086 = vmatmul.f32.gmra.mxu0 %v771
        %v1087 = vpop.f32.mrf.mxu0
        %v1088 = vadd.f32 0.0, %v1087
        %1089 = vmatmul.f32.gmra.mxu0 %v774
        %v1090 = vpop.f32.mrf.mxu0
        %v1091 = vadd.f32 0.0, %v1090
        %1092 = vmatmul.f32.gmra.mxu0 %v777
        %v1093 = vpop.f32.mrf.mxu0
        %v1094 = vadd.f32 0.0, %v1093
        %1095 = vmatmul.f32.gmra.mxu0 %v780
        %v1096 = vpop.f32.mrf.mxu0
        %v1097 = vadd.f32 0.0, %v1096
        %1098 = vmatmul.f32.gmra.mxu0 %v783
        %v1099 = vpop.f32.mrf.mxu0
        %v1100 = vadd.f32 0.0, %v1099
        %1101 = vmatmul.f32.gmra.mxu0 %v786
        %v1102 = vpop.f32.mrf.mxu0
        %v1103 = vadd.f32 0.0, %v1102
        %1104 = vmatmul.f32.gmra.mxu0 %v789
        %v1105 = vpop.f32.mrf.mxu0
        %v1106 = vadd.f32 0.0, %v1105
        %1107 = vmatmul.f32.gmra.mxu0 %v792
        %v1108 = vpop.f32.mrf.mxu0
        %v1109 = vadd.f32 0.0, %v1108
        %1110 = vmatmul.f32.gmra.mxu0 %v795
        %v1111 = vpop.f32.mrf.mxu0
        %v1112 = vadd.f32 0.0, %v1111
        %1113 = vmatmul.f32.gmra.mxu0 %v798
        %v1114 = vpop.f32.mrf.mxu0
        %v1115 = vadd.f32 0.0, %v1114
        %1116 = vmatmul.f32.gmra.mxu0 %v801
        %v1117 = vpop.f32.mrf.mxu0
        %v1118 = vadd.f32 0.0, %v1117
        %1119 = vmatmul.f32.gmra.mxu0 %v804
        %v1120 = vpop.f32.mrf.mxu0
        %v1121 = vadd.f32 0.0, %v1120
        %1122 = vmatmul.f32.gmra.mxu0 %v807
        %v1123 = vpop.f32.mrf.mxu0
        %v1124 = vadd.f32 0.0, %v1123
        %1125 = vmatmul.f32.gmra.mxu0 %v810
        %v1126 = vpop.f32.mrf.mxu0
        %v1127 = vadd.f32 0.0, %v1126
        %1128 = vmatmul.f32.gmra.mxu0 %v813
        %v1129 = vpop.f32.mrf.mxu0
        %v1130 = vadd.f32 0.0, %v1129
        %1131 = vmatmul.f32.gmra.mxu0 %v816
        %v1132 = vpop.f32.mrf.mxu0
        %v1133 = vadd.f32 0.0, %v1132
        %1134 = vmatmul.f32.gmra.mxu0 %v819
        %v1135 = vpop.f32.mrf.mxu0
        %v1136 = vadd.f32 0.0, %v1135
        %1137 = vmatmul.f32.gmra.mxu0 %v822
        %v1138 = vpop.f32.mrf.mxu0
        %v1139 = vadd.f32 0.0, %v1138
        %1140 = vmatmul.f32.gmra.mxu0 %v825
        %v1141 = vpop.f32.mrf.mxu0
        %v1142 = vadd.f32 0.0, %v1141
        %1143 = vmatmul.f32.gmra.mxu0 %v828
        %v1144 = vpop.f32.mrf.mxu0
        %v1145 = vadd.f32 0.0, %v1144
        %1146 = vmatmul.f32.gmra.mxu0 %v831
        %v1147 = vpop.f32.mrf.mxu0
        %v1148 = vadd.f32 0.0, %v1147
        %1149 = vmatmul.f32.gmra.mxu0 %v834
        %v1150 = vpop.f32.mrf.mxu0
        %v1151 = vadd.f32 0.0, %v1150
        %1152 = vmatmul.f32.gmra.mxu0 %v837
        %v1153 = vpop.f32.mrf.mxu0
        %v1154 = vadd.f32 0.0, %v1153
        %1155 = vmatmul.f32.gmra.mxu0 %v840
        %v1156 = vpop.f32.mrf.mxu0
        %v1157 = vadd.f32 0.0, %v1156
        %1158 = vmatmul.f32.gmra.mxu0 %v843
        %v1159 = vpop.f32.mrf.mxu0
        %v1160 = vadd.f32 0.0, %v1159
        %1161 = vmatmul.f32.gmra.mxu0 %v846
        %v1162 = vpop.f32.mrf.mxu0
        %v1163 = vadd.f32 0.0, %v1162
        %1164 = vmatmul.f32.gmra.mxu0 %v849
        %v1165 = vpop.f32.mrf.mxu0
        %v1166 = vadd.f32 0.0, %v1165
        %1167 = vmatmul.f32.gmra.mxu0 %v852
        %v1168 = vpop.f32.mrf.mxu0
        %v1169 = vadd.f32 0.0, %v1168
        %1170 = vmatmul.f32.gmra.mxu0 %v855
        %v1171 = vpop.f32.mrf.mxu0
        %v1172 = vadd.f32 0.0, %v1171
        %1173 = vmatmul.f32.gmra.mxu0 %v858
        %v1174 = vpop.f32.mrf.mxu0
        %v1175 = vadd.f32 0.0, %v1174
        %1176 = vmatmul.f32.gmra.mxu0 %v861
        %v1177 = vpop.f32.mrf.mxu0
        %v1178 = vadd.f32 0.0, %v1177
        %1179 = vmatmul.f32.gmra.mxu0 %v864
        %v1180 = vpop.f32.mrf.mxu0
        %v1181 = vadd.f32 0.0, %v1180
        %1182 = vmatmul.f32.gmra.mxu0 %v867
        %v1183 = vpop.f32.mrf.mxu0
        %v1184 = vadd.f32 0.0, %v1183
        %1185 = vmatmul.f32.gmra.mxu0 %v870
        %v1186 = vpop.f32.mrf.mxu0
        %v1187 = vadd.f32 0.0, %v1186
        %1188 = vmatmul.f32.gmra.mxu0 %v873
        %v1189 = vpop.f32.mrf.mxu0
        %v1190 = vadd.f32 0.0, %v1189
        %1191 = vmatmul.f32.gmra.mxu0 %v876
        %v1192 = vpop.f32.mrf.mxu0
        %v1193 = vadd.f32 0.0, %v1192
        %1194 = vmatmul.f32.gmra.mxu0 %v879
        %v1195 = vpop.f32.mrf.mxu0
        %v1196 = vadd.f32 0.0, %v1195
        %1197 = vmatmul.f32.gmra.mxu0 %v882
        %v1198 = vpop.f32.mrf.mxu0
        %v1199 = vadd.f32 0.0, %v1198
        %1200 = vmatmul.f32.gmra.mxu0 %v885
        %v1201 = vpop.f32.mrf.mxu0
        %v1202 = vadd.f32 0.0, %v1201
        %1203 = vmatmul.f32.gmra.mxu0 %v888
        %v1204 = vpop.f32.mrf.mxu0
        %v1205 = vadd.f32 0.0, %v1204
        %1206 = vmatmul.f32.gmra.mxu0 %v891
        %v1207 = vpop.f32.mrf.mxu0
        %v1208 = vadd.f32 0.0, %v1207
        %1209 = vmatmul.f32.gmra.mxu0 %v894
        %v1210 = vpop.f32.mrf.mxu0
        %v1211 = vadd.f32 0.0, %v1210
        %1212 = vmatmul.f32.gmra.mxu0 %v897
        %v1213 = vpop.f32.mrf.mxu0
        %v1214 = vadd.f32 0.0, %v1213
        %1215 = vmatmul.f32.gmra.mxu0 %v900
        %v1216 = vpop.f32.mrf.mxu0
        %v1217 = vadd.f32 0.0, %v1216
        %1218 = vmatmul.f32.gmra.mxu0 %v903
        %v1219 = vpop.f32.mrf.mxu0
        %v1220 = vadd.f32 0.0, %v1219
        %1221 = vmatmul.f32.gmra.mxu0 %v906
        %v1222 = vpop.f32.mrf.mxu0
        %v1223 = vadd.f32 0.0, %v1222
        %1224 = vmatmul.f32.gmra.mxu0 %v909
        %v1225 = vpop.f32.mrf.mxu0
        %v1226 = vadd.f32 0.0, %v1225
        %1227 = vmatmul.f32.gmra.mxu0 %v912
        %v1228 = vpop.f32.mrf.mxu0
        %v1229 = vadd.f32 0.0, %v1228
        %1230 = vmatmul.f32.gmra.mxu0 %v915
        %v1231 = vpop.f32.mrf.mxu0
        %v1232 = vadd.f32 0.0, %v1231
        %1233 = vmatmul.f32.gmra.mxu0 %v918
        %v1234 = vpop.f32.mrf.mxu0
        %v1235 = vadd.f32 0.0, %v1234
        %1236 = vmatmul.f32.gmra.mxu0 %v921
        %v1237 = vpop.f32.mrf.mxu0
        %v1238 = vadd.f32 0.0, %v1237
        %1239 = vmatmul.f32.gmra.mxu0 %v924
        %v1240 = vpop.f32.mrf.mxu0
        %v1241 = vadd.f32 0.0, %v1240
        %1242 = vmatmul.f32.gmra.mxu0 %v927
        %v1243 = vpop.f32.mrf.mxu0
        %v1244 = vadd.f32 0.0, %v1243
        %1245 = vmatmul.f32.gmra.mxu0 %v930
        %v1246 = vpop.f32.mrf.mxu0
        %v1247 = vadd.f32 0.0, %v1246
        %1248 = vmatmul.f32.gmra.mxu0 %v933
        %v1249 = vpop.f32.mrf.mxu0
        %v1250 = vadd.f32 0.0, %v1249
        %1251 = vmatmul.f32.gmra.mxu0 %v936
        %v1252 = vpop.f32.mrf.mxu0
        %v1253 = vadd.f32 0.0, %v1252
        %1254 = vmatmul.f32.gmra.mxu0 %v939
        %v1255 = vpop.f32.mrf.mxu0
        %v1256 = vadd.f32 0.0, %v1255
        %1257 = vmatmul.f32.gmra.mxu0 %v942
        %v1258 = vpop.f32.mrf.mxu0
        %v1259 = vadd.f32 0.0, %v1258
        %1260 = vmatmul.f32.gmra.mxu0 %v945
        %v1261 = vpop.f32.mrf.mxu0
        %v1262 = vadd.f32 0.0, %v1261
        %1263 = vmatmul.f32.gmra.mxu0 %v948
        %v1264 = vpop.f32.mrf.mxu0
        %v1265 = vadd.f32 0.0, %v1264
        %1266 = vmatmul.f32.gmra.mxu0 %v951
        %v1267 = vpop.f32.mrf.mxu0
        %v1268 = vadd.f32 0.0, %v1267
        %1269 = vmatmul.f32.gmra.mxu0 %v954
        %v1270 = vpop.f32.mrf.mxu0
        %v1271 = vadd.f32 0.0, %v1270
        %1272 = vmatmul.f32.gmra.mxu0 %v957
        %v1273 = vpop.f32.mrf.mxu0
        %v1274 = vadd.f32 0.0, %v1273
        %1275 = vmatmul.f32.gmra.mxu0 %v960
        %v1276 = vpop.f32.mrf.mxu0
        %v1277 = vadd.f32 0.0, %v1276
        %1278 = vmatmul.f32.gmra.mxu0 %v963
        %v1279 = vpop.f32.mrf.mxu0
        %v1280 = vadd.f32 0.0, %v1279
        %1281 = vmatmul.f32.gmra.mxu0 %v966
        %v1282 = vpop.f32.mrf.mxu0
        %v1283 = vadd.f32 0.0, %v1282
        %1284 = vmatmul.f32.gmra.mxu0 %v969
        %v1285 = vpop.f32.mrf.mxu0
        %v1286 = vadd.f32 0.0, %v1285
        %1287 = vmatmul.f32.gmra.mxu0 %v972
        %v1288 = vpop.f32.mrf.mxu0
        %v1289 = vadd.f32 0.0, %v1288
        %1290 = vmatmul.f32.gmra.mxu0 %v975
        %v1291 = vpop.f32.mrf.mxu0
        %v1292 = vadd.f32 0.0, %v1291
        %1293 = vmatmul.f32.gmra.mxu0 %v978
        %v1294 = vpop.f32.mrf.mxu0
        %v1295 = vadd.f32 0.0, %v1294
        %1296 = vmatmul.f32.gmra.mxu0 %v981
        %v1297 = vpop.f32.mrf.mxu0
        %v1298 = vadd.f32 0.0, %v1297
        %1299 = vmatmul.f32.gmra.mxu0 %v984
        %v1300 = vpop.f32.mrf.mxu0
        %v1301 = vadd.f32 0.0, %v1300
        %1302 = vmatmul.f32.gmra.mxu0 %v987
        %v1303 = vpop.f32.mrf.mxu0
        %v1304 = vadd.f32 0.0, %v1303
        %1305 = vmatmul.f32.gmra.mxu0 %v990
        %v1306 = vpop.f32.mrf.mxu0
        %v1307 = vadd.f32 0.0, %v1306
        %1308 = vmatmul.f32.gmra.mxu0 %v993
        %v1309 = vpop.f32.mrf.mxu0
        %v1310 = vadd.f32 0.0, %v1309
        %1311 = vmatmul.f32.gmra.mxu0 %v996
        %v1312 = vpop.f32.mrf.mxu0
        %v1313 = vadd.f32 0.0, %v1312
        %1314 = vmatmul.f32.gmra.mxu0 %v999
        %v1315 = vpop.f32.mrf.mxu0
        %v1316 = vadd.f32 0.0, %v1315
        %1317 = vmatmul.f32.gmra.mxu0 %v1002
        %v1318 = vpop.f32.mrf.mxu0
        %v1319 = vadd.f32 0.0, %v1318
        %1320 = vmatmul.f32.gmra.mxu0 %v1005
        %v1321 = vpop.f32.mrf.mxu0
        %v1322 = vadd.f32 0.0, %v1321
        %1323 = vmatmul.f32.gmra.mxu0 %v1008
        %v1324 = vpop.f32.mrf.mxu0
        %v1325 = vadd.f32 0.0, %v1324
        %1326 = vdwg.mxu0
        %v1327 = vmax.f32 %v1028, %v1103
        %v1328 = vmax.f32 %v1031, %v1106
        %v1329 = vmax.f32 %v1034, %v1109
        %v1330 = vmax.f32 %v1037, %v1112
        %v1331 = vmax.f32 %v1040, %v1115
        %v1332 = vmax.f32 %v1043, %v1118
        %v1333 = vmax.f32 %v1046, %v1121
        %v1334 = vmax.f32 %v1049, %v1124
        %v1335 = vmax.f32 %v1052, %v1127
        %v1336 = vmax.f32 %v1055, %v1130
        %v1337 = vmax.f32 %v1058, %v1133
        %v1338 = vmax.f32 %v1061, %v1136
        %v1339 = vmax.f32 %v1064, %v1139
        %v1340 = vmax.f32 %v1067, %v1142
        %v1341 = vmax.f32 %v1070, %v1145
        %v1342 = vmax.f32 %v1073, %v1148
        %v1343 = vmax.f32 %v1076, %v1151
        %v1344 = vmax.f32 %v1079, %v1154
        %v1345 = vmax.f32 %v1082, %v1157
        %v1346 = vmax.f32 %v1085, %v1160
        %v1347 = vmax.f32 %v1088, %v1163
        %v1348 = vmax.f32 %v1091, %v1166
        %v1349 = vmax.f32 %v1094, %v1169
        %v1350 = vmax.f32 %v1097, %v1172
        %v1351 = vmax.f32 %v1100, %v1175
        %v1352 = vmax.f32 %v1178, %v1253
        %v1353 = vmax.f32 %v1181, %v1256
        %v1354 = vmax.f32 %v1184, %v1259
        %v1355 = vmax.f32 %v1187, %v1262
        %v1356 = vmax.f32 %v1190, %v1265
        %v1357 = vmax.f32 %v1193, %v1268
        %v1358 = vmax.f32 %v1196, %v1271
        %v1359 = vmax.f32 %v1199, %v1274
        %v1360 = vmax.f32 %v1202, %v1277
        %v1361 = vmax.f32 %v1205, %v1280
        %v1362 = vmax.f32 %v1208, %v1283
        %v1363 = vmax.f32 %v1211, %v1286
        %v1364 = vmax.f32 %v1214, %v1289
        %v1365 = vmax.f32 %v1217, %v1292
        %v1366 = vmax.f32 %v1220, %v1295
        %v1367 = vmax.f32 %v1223, %v1298
        %v1368 = vmax.f32 %v1226, %v1301
        %v1369 = vmax.f32 %v1229, %v1304
        %v1370 = vmax.f32 %v1232, %v1307
        %v1371 = vmax.f32 %v1235, %v1310
        %v1372 = vmax.f32 %v1238, %v1313
        %v1373 = vmax.f32 %v1241, %v1316
        %v1374 = vmax.f32 %v1244, %v1319
        %v1375 = vmax.f32 %v1247, %v1322
        %v1376 = vmax.f32 %v1250, %v1325
        %v1377 = vmax.f32 %v1327, %v1352
        %v1378 = vmax.f32 %v1328, %v1353
        %v1379 = vmax.f32 %v1329, %v1354
        %v1380 = vmax.f32 %v1330, %v1355
        %v1381 = vmax.f32 %v1331, %v1356
        %v1382 = vmax.f32 %v1332, %v1357
        %v1383 = vmax.f32 %v1333, %v1358
        %v1384 = vmax.f32 %v1334, %v1359
        %v1385 = vmax.f32 %v1335, %v1360
        %v1386 = vmax.f32 %v1336, %v1361
        %v1387 = vmax.f32 %v1337, %v1362
        %v1388 = vmax.f32 %v1338, %v1363
        %v1389 = vmax.f32 %v1339, %v1364
        %v1390 = vmax.f32 %v1340, %v1365
        %v1391 = vmax.f32 %v1341, %v1366
        %v1392 = vmax.f32 %v1342, %v1367
        %v1393 = vmax.f32 %v1343, %v1368
        %v1394 = vmax.f32 %v1344, %v1369
        %v1395 = vmax.f32 %v1345, %v1370
        %v1396 = vmax.f32 %v1346, %v1371
        %v1397 = vmax.f32 %v1347, %v1372
        %v1398 = vmax.f32 %v1348, %v1373
        %v1399 = vmax.f32 %v1349, %v1374
        %v1400 = vmax.f32 %v1350, %v1375
        %v1401 = vmax.f32 %v1351, %v1376
        %v1402 = vld [vmem:[%s2] sm:$0x1]
        %v1404 = vperm.slane %v1402, 0
        %v1406 = vadd.f32 %v1377, %v1404
        %v1407 = vadd.f32 %v1378, %v1404
        %v1408 = vadd.f32 %v1379, %v1404
        %v1409 = vadd.f32 %v1380, %v1404
        %v1410 = vadd.f32 %v1381, %v1404
        %v1411 = vadd.f32 %v1382, %v1404
        %v1412 = vadd.f32 %v1383, %v1404
        %v1413 = vadd.f32 %v1384, %v1404
        %v1414 = vadd.f32 %v1385, %v1404
        %v1415 = vadd.f32 %v1386, %v1404
        %v1416 = vadd.f32 %v1387, %v1404
        %v1417 = vadd.f32 %v1388, %v1404
        %v1418 = vadd.f32 %v1389, %v1404
        %v1419 = vadd.f32 %v1390, %v1404
        %v1420 = vadd.f32 %v1391, %v1404
        %v1421 = vadd.f32 %v1392, %v1404
        %v1422 = vadd.f32 %v1393, %v1404
        %v1423 = vadd.f32 %v1394, %v1404
        %v1424 = vadd.f32 %v1395, %v1404
        %v1425 = vadd.f32 %v1396, %v1404
        %v1426 = vadd.f32 %v1397, %v1404
        %v1427 = vadd.f32 %v1398, %v1404
        %v1428 = vadd.f32 %v1399, %v1404
        %v1429 = vadd.f32 %v1400, %v1404
        %v1430 = vadd.f32 %v1401, %v1404
        %v1431 = vmax.f32 %v1406, 0.0
        %v1432 = vmax.f32 %v1407, 0.0
        %v1433 = vmax.f32 %v1408, 0.0
        %v1434 = vmax.f32 %v1409, 0.0
        %v1435 = vmax.f32 %v1410, 0.0
        %v1436 = vmax.f32 %v1411, 0.0
        %v1437 = vmax.f32 %v1412, 0.0
        %v1438 = vmax.f32 %v1413, 0.0
        %v1439 = vmax.f32 %v1414, 0.0
        %v1440 = vmax.f32 %v1415, 0.0
        %v1441 = vmax.f32 %v1416, 0.0
        %v1442 = vmax.f32 %v1417, 0.0
        %v1443 = vmax.f32 %v1418, 0.0
        %v1444 = vmax.f32 %v1419, 0.0
        %v1445 = vmax.f32 %v1420, 0.0
        %v1446 = vmax.f32 %v1421, 0.0
        %v1447 = vmax.f32 %v1422, 0.0
        %v1448 = vmax.f32 %v1423, 0.0
        %v1449 = vmax.f32 %v1424, 0.0
        %v1450 = vmax.f32 %v1425, 0.0
        %v1451 = vmax.f32 %v1426, 0.0
        %v1452 = vmax.f32 %v1427, 0.0
        %v1453 = vmax.f32 %v1428, 0.0
        %v1454 = vmax.f32 %v1429, 0.0
        %v1455 = vmax.f32 %v1430, 0.0
        %1456 = vst [vmem:[%s603] sm:$0xff] %v1431
        %1457 = vst [vmem:[%s603 + $0x8] sm:$0xff] %v1432
        %1458 = vst [vmem:[%s603 + $0x10] sm:$0xff] %v1433
        %1459 = vst [vmem:[%s603 + $0x18] sm:$0xff] %v1434
        %1460 = vst [vmem:[%s603 + $0x20] sm:$0xff] %v1435
        %1461 = vst [vmem:[%s603 + $0x28] sm:$0xff] %v1436
        %1462 = vst [vmem:[%s603 + $0x30] sm:$0xff] %v1437
        %1463 = vst [vmem:[%s603 + $0x38] sm:$0xff] %v1438
        %1464 = vst [vmem:[%s603 + $0x40] sm:$0xff] %v1439
        %1465 = vst [vmem:[%s603 + $0x48] sm:$0xff] %v1440
        %1466 = vst [vmem:[%s603 + $0x50] sm:$0xff] %v1441
        %1467 = vst [vmem:[%s603 + $0x58] sm:$0xff] %v1442
        %1468 = vst [vmem:[%s603 + $0x60] sm:$0xff] %v1443
        %1469 = vst [vmem:[%s603 + $0x68] sm:$0xff] %v1444
        %1470 = vst [vmem:[%s603 + $0x70] sm:$0xff] %v1445
        %1471 = vst [vmem:[%s603 + $0x78] sm:$0xff] %v1446
        %1472 = vst [vmem:[%s603 + $0x80] sm:$0xff] %v1447
        %1473 = vst [vmem:[%s603 + $0x88] sm:$0xff] %v1448
        %1474 = vst [vmem:[%s603 + $0x90] sm:$0xff] %v1449
        %1475 = vst [vmem:[%s603 + $0x98] sm:$0xff] %v1450
        %1476 = vst [vmem:[%s603 + $0xa0] sm:$0xff] %v1451
        %1477 = vst [vmem:[%s603 + $0xa8] sm:$0xff] %v1452
        %1478 = vst [vmem:[%s603 + $0xb0] sm:$0xff] %v1453
        %1479 = vst [vmem:[%s603 + $0xb8] sm:$0xff] %v1454
        %1480 = vst [vmem:[%s603 + $0xc0] sm:$0xff] %v1455
        %s1481 = smul.u32 25, %s14
        %p1482 = scmp.lt.s32.totalorder %s1481, 49
        %s1483 = scalar_select %p1482, %s1481, 49
        %s1484 = smul.addr %s1483, 8
        %s1485 = scalar_lea.vmem %s3, %s1484
        // Predicated region
        $region71: #{lenet_forward.3} parent=65 // pred_check
          %p1486 = pneg %p100
        $region72: #{lenet_forward.3} parent=65 // pred_check_branch
          %1488 = sbr.rel (%p1486) target = $region74
        $region73: #{lenet_forward.3} parent=65 // pred_region
          %s1489 = smul.u32 25, %s14
        $region74: #{lenet_forward.3} parent=65 // pred_fallthru
          _
      $region66: #{lenet_forward.3} parent=5 // pred_fallthru
        _
      %p1490 = scmp.le.s32.totalorder 2, %s9
      // Predicated region
      $region75: #{lenet_forward.3} parent=5 // pred_check
        %p1491 = pneg %p1490
      $region76: #{lenet_forward.3} parent=5 // pred_check_branch
        %1493 = sbr.rel (%p1491) target = $region78
      $region77: #{lenet_forward.3} parent=5 // pred_region
        %s1494 = ssub.s32 %s9, 2
        // Predicated region
        $region79: #{lenet_forward.3} parent=77 // pred_check
          %p1495 = pneg %p106
        $region80: #{lenet_forward.3} parent=77 // pred_check_branch
          %1497 = sbr.rel (%p1495) target = $region82
        $region81: #{lenet_forward.3} parent=77 // pred_region
          %s1498 = smul.u32 25, %s15
          %p1499 = scmp.lt.s32.totalorder %s1498, 49
          %s1500 = scalar_select %p1499, %s1498, 49
          %s1501 = smul.addr %s1500, 8
          %s1502 = scalar_lea.vmem %s3, %s1501
        $region82: #{lenet_forward.3} parent=77 // pred_fallthru
          _
      $region78: #{lenet_forward.3} parent=5 // pred_fallthru
        _
    $region6: #{lenet_forward.3} parent=1 // loop_footer
      %s13 = sadd.s32 1, %s9
    $region7: #{lenet_forward.3} parent=1 // loop_footer_branch
      %8 = sbr.rel target = $region3
    $region8: #{lenet_forward.3} parent=1 // loop_exit
      _

// kernel: lenet_forward.4
$region0: #{lenet_forward.4}
  #allocation0 [shape = 'u32[]', space=smem, size = 0x4, offset = 0x4, fixed_abs, tag = 'smem constant byte address 0x4 - core index']
  #allocation1 [shape = 'u32[72,128]{1,0:T(1,128)}', space=vmem, size = 0x9000, scoped, tag = 'internal scratch']
  %s0 = inlined_call_operand.vmem [shape: f32[4,64,160], index: 0, kind: input, shape index: {}]
  %s1 = inlined_call_operand.vmem [shape: f32[160,128], index: 1, kind: input, shape index: {}]
  %s2 = inlined_call_operand.vmem [shape: f32[1,128], index: 2, kind: input, shape index: {}]
  %s3 = inlined_call_operand.vmem [shape: f32[64,128], index: 3, kind: output, shape index: {}]
  %s4 = sld [smem:[#allocation0]]
  $region68: #{lenet_forward.4} parent=0
    _
  %s6 = ssub.s32 1, %s4
  %s7 = scalar_select 0, %s6, %s4
  $region1: #{lenet_forward.4} parent=0
    #allocation2 [shape = 'u8[262144]{0}', space=vmem, size = 0x40000, scoped, tag = 'input window, operand 0']
    loop: start=0, step=1, limit=4
    $region2: #{lenet_forward.4} parent=1 // loop_pre_header
      _
    $region3: #{lenet_forward.4} parent=1 // loop_header
      %s9 = sphi 0, %s13
      %p10 = scmp.ge.s32.totalorder %s9, 4
      %s19 = sphi 0, %s21
      %s22 = sphi 0, %s19
      %s23 = sphi 0, %s22
      %s39 = sphi 0, %s23
      %s43 = sphi 0, %s43
      %s45 = sphi 0, %s43
      %s46 = sphi 0, %s45
      %s60 = sphi 0, %s46
      %s64 = sphi 0, %s64
      %s66 = sphi 0, %s64
      %s67 = sphi 0, %s66
      %s81 = sphi 0, %s67
      %s87 = sphi 0, %s89
      %s90 = sphi 0, %s87
      %s91 = sphi 0, %s90
      %s107 = sphi 0, %s91
    $region4: #{lenet_forward.4} parent=1 // loop_header_branch
      %12 = sbr.rel (%p10) target = $region8
    $region5: #{lenet_forward.4} parent=1 // loop_body
      %s14 = ssub.s32 %s9, 1
      %s15 = ssub.s32 %s9, 2
      %s16 = sadd.s32 %s9, 1
      %s17 = ssub.s32 %s9, %s16
      %p18 = scmp.eq.s32.totalorder %s17, 0
      %s20 = sadd.s32 %s19, 1
      %s21 = scalar_select %p18, %s19, %s20
      %p24 = pneg %p18
      %p25 = scmp.eq.s32.totalorder %s9, 1
      %p26 = por %p24, %p25
      %p27 = scmp.ne.s32.totalorder %s19, %s22
      %p28 = scmp.eq.s32.totalorder %s9, 0
      %p29 = por %p27, %p28
      %p30 = scmp.ne.s32.totalorder %s19, %s22
      %p31 = scmp.eq.s32.totalorder %s14, 1
      %p32 = por %p30, %p31
      %p33 = scmp.ne.s32.totalorder %s22, %s23
      %p34 = scmp.eq.s32.totalorder %s14, 0
      %p35 = por %p33, %p34
      %p36 = scmp.ne.s32.totalorder %s22, %s23
      %p37 = scmp.eq.s32.totalorder %s15, 1
      %p38 = por %p36, %p37
      %p40 = scmp.ne.s32.totalorder %s23, %s39
      %p41 = scmp.eq.s32.totalorder %s15, 0
      %p42 = por %p40, %p41
      %s44 = sadd.s32 %s43, 1
      %p47 = scmp.eq.s32.totalorder %s9, 1
      %p48 = scmp.ne.s32.totalorder %s43, %s45
      %p49 = scmp.eq.s32.totalorder %s9, 0
      %p50 = por %p48, %p49
      %p51 = scmp.ne.s32.totalorder %s43, %s45
      %p52 = scmp.eq.s32.totalorder %s14, 1
      %p53 = por %p51, %p52
      %p54 = scmp.ne.s32.totalorder %s45, %s46
      %p55 = scmp.eq.s32.totalorder %s14, 0
      %p56 = por %p54, %p55
      %p57 = scmp.ne.s32.totalorder %s45, %s46
      %p58 = scmp.eq.s32.totalorder %s15, 1
      %p59 = por %p57, %p58
      %p61 = scmp.ne.s32.totalorder %s46, %s60
      %p62 = scmp.eq.s32.totalorder %s15, 0
      %p63 = por %p61, %p62
      %s65 = sadd.s32 %s64, 1
      %p68 = scmp.eq.s32.totalorder %s9, 1
      %p69 = scmp.ne.s32.totalorder %s64, %s66
      %p70 = scmp.eq.s32.totalorder %s9, 0
      %p71 = por %p69, %p70
      %p72 = scmp.ne.s32.totalorder %s64, %s66
      %p73 = scmp.eq.s32.totalorder %s14, 1
      %p74 = por %p72, %p73
      %p75 = scmp.ne.s32.totalorder %s66, %s67
      %p76 = scmp.eq.s32.totalorder %s14, 0
      %p77 = por %p75, %p76
      %p78 = scmp.ne.s32.totalorder %s66, %s67
      %p79 = scmp.eq.s32.totalorder %s15, 1
      %p80 = por %p78, %p79
      %p82 = scmp.ne.s32.totalorder %s67, %s81
      %p83 = scmp.eq.s32.totalorder %s15, 0
      %p84 = por %p82, %p83
      %s85 = ssub.s32 %s9, %s16
      %p86 = scmp.eq.s32.totalorder %s85, 0
      %s88 = sadd.s32 %s87, 1
      %s89 = scalar_select %p86, %s87, %s88
      %p92 = pneg %p86
      %p93 = scmp.eq.s32.totalorder %s9, 1
      %p94 = por %p92, %p93
      %p95 = scmp.ne.s32.totalorder %s87, %s90
      %p96 = scmp.eq.s32.totalorder %s9, 0
      %p97 = por %p95, %p96
      %p98 = scmp.ne.s32.totalorder %s87, %s90
      %p99 = scmp.eq.s32.totalorder %s14, 1
      %p100 = por %p98, %p99
      %p101 = scmp.ne.s32.totalorder %s90, %s91
      %p102 = scmp.eq.s32.totalorder %s14, 0
      %p103 = por %p101, %p102
      %p104 = scmp.ne.s32.totalorder %s90, %s91
      %p105 = scmp.eq.s32.totalorder %s15, 1
      %p106 = por %p104, %p105
      %p108 = scmp.ne.s32.totalorder %s91, %s107
      %p109 = scmp.eq.s32.totalorder %s15, 0
      %p110 = por %p108, %p109
      %p111 = scmp.le.s32.totalorder 1, %s9
      %p112 = scmp.lt.s32.totalorder %s9, 3
      %p113 = pnand %p111, %p112
      %p114 = pneg %p113
      // Predicated region
      $region9: #{lenet_forward.4} parent=5 // pred_check
        _
      $region10: #{lenet_forward.4} parent=5 // pred_check_branch
        %116 = sbr.rel (%p113) target = $region12
      $region11: #{lenet_forward.4} parent=5 // pred_region
        %s117 = ssub.s32 %s9, 1
        // Predicated region
        $region13: #{lenet_forward.4} parent=11 // pred_check
          %p118 = pneg %p56
        $region14: #{lenet_forward.4} parent=11 // pred_check_branch
          %120 = sbr.rel (%p118) target = $region16
        $region15: #{lenet_forward.4} parent=11 // pred_region
          _
        $region16: #{lenet_forward.4} parent=11 // pred_fallthru
          _
        // Predicated region
        $region17: #{lenet_forward.4} parent=11 // pred_check
          %p121 = pneg %p77
        $region18: #{lenet_forward.4} parent=11 // pred_check_branch
          %123 = sbr.rel (%p121) target = $region20
        $region19: #{lenet_forward.4} parent=11 // pred_region
          _
        $region20: #{lenet_forward.4} parent=11 // pred_fallthru
          _
      $region12: #{lenet_forward.4} parent=5 // pred_fallthru
        _
      %p124 = scmp.lt.s32.totalorder %s9, 2
      // Predicated region
      $region21: #{lenet_forward.4} parent=5 // pred_check
        %p125 = pneg %p124
      $region22: #{lenet_forward.4} parent=5 // pred_check_branch
        %127 = sbr.rel (%p125) target = $region24
      $region23: #{lenet_forward.4} parent=5 // pred_region
        // Predicated region
        $region25: #{lenet_forward.4} parent=23 // pred_check
          %p128 = pneg %p29
        $region26: #{lenet_forward.4} parent=23 // pred_check_branch
          %130 = sbr.rel (%p128) target = $region28
        $region27: #{lenet_forward.4} parent=23 // pred_region
          %s131 = sand.u32 %s19, 1
          %s132 = sand.u32 %s19, 1
          %s133 = smul.addr %s132, 256
          %s134 = scalar_lea.vmem [#allocation2], %s133
          %s135 = smul.u32 4, %s9
          %s136 = smul.addr %s135, 2
          %s137 = smul.addr %s136, 8
          %s138 = scalar_lea.vmem %s0, %s137
          // Predicated region
          $region29: #{lenet_forward.4} parent=27 // pred_check
            _
          $region30: #{lenet_forward.4} parent=27 // pred_check_branch
            %140 = sbr.rel (0) target = $region32
          $region31: #{lenet_forward.4} parent=27 // pred_region
            // Predicated region
            $region33: #{lenet_forward.4} parent=31 // pred_check
              _
            $region34: #{lenet_forward.4} parent=31 // pred_check_branch
              %142 = sbr.rel (0) target = $region36
            $region35: #{lenet_forward.4} parent=31 // pred_region
              loop: start=0, step=1, limit=1
              $region37: #{lenet_forward.4} parent=35 // loop_pre_header
                _
              $region38: #{lenet_forward.4} parent=35 // loop_header
                %s144 = sphi 0, %s148
                %p145 = scmp.ge.s32.totalorder %s144, 1
                %s149 = sphi %s138, %s138
                %s150 = sphi %s134, %s134
              $region39: #{lenet_forward.4} parent=35 // loop_header_branch
                %147 = sbr.rel (%p145) target = $region43
              $region40: #{lenet_forward.4} parent=35 // loop_body
                %v151 = vld [vmem:[%s149] sm:$0xff]
                %152 = vst [vmem:[%s150] sm:$0xff] %v151
                %v153 = vld [vmem:[%s149 + $0x8] sm:$0xff]
                %154 = vst [vmem:[%s150 + $0x8] sm:$0xff] %v153
                %v155 = vld [vmem:[%s149 + $0x10] sm:$0xff]
                %156 = vst [vmem:[%s150 + $0x10] sm:$0xff] %v155
                %v157 = vld [vmem:[%s149 + $0x18] sm:$0xff]
                %158 = vst [vmem:[%s150 + $0x18] sm:$0xff] %v157
                %v159 = vld [vmem:[%s149 + $0x20] sm:$0xff]
                %160 = vst [vmem:[%s150 + $0x20] sm:$0xff] %v159
                %v161 = vld [vmem:[%s149 + $0x28] sm:$0xff]
                %162 = vst [vmem:[%s150 + $0x28] sm:$0xff] %v161
                %v163 = vld [vmem:[%s149 + $0x30] sm:$0xff]
                %164 = vst [vmem:[%s150 + $0x30] sm:$0xff] %v163
                %v165 = vld [vmem:[%s149 + $0x38] sm:$0xff]
                %166 = vst [vmem:[%s150 + $0x38] sm:$0xff] %v165
                %v167 = vld [vmem:[%s149 + $0x80] sm:$0xff]
                %168 = vst [vmem:[%s150 + $0x40] sm:$0xff] %v167
                %v169 = vld [vmem:[%s149 + $0x88] sm:$0xff]
                %170 = vst [vmem:[%s150 + $0x48] sm:$0xff] %v169
                %v171 = vld [vmem:[%s149 + $0x90] sm:$0xff]
                %172 = vst [vmem:[%s150 + $0x50] sm:$0xff] %v171
                %v173 = vld [vmem:[%s149 + $0x98] sm:$0xff]
                %174 = vst [vmem:[%s150 + $0x58] sm:$0xff] %v173
                %v175 = vld [vmem:[%s149 + $0xa0] sm:$0xff]
                %176 = vst [vmem:[%s150 + $0x60] sm:$0xff] %v175
                %v177 = vld [vmem:[%s149 + $0xa8] sm:$0xff]
                %178 = vst [vmem:[%s150 + $0x68] sm:$0xff] %v177
                %v179 = vld [vmem:[%s149 + $0xb0] sm:$0xff]
                %180 = vst [vmem:[%s150 + $0x70] sm:$0xff] %v179
                %v181 = vld [vmem:[%s149 + $0xb8] sm:$0xff]
                %182 = vst [vmem:[%s150 + $0x78] sm:$0xff] %v181
                %v183 = vld [vmem:[%s149 + $0x100] sm:$0xff]
                %184 = vst [vmem:[%s150 + $0x80] sm:$0xff] %v183
                %v185 = vld [vmem:[%s149 + $0x108] sm:$0xff]
                %186 = vst [vmem:[%s150 + $0x88] sm:$0xff] %v185
                %v187 = vld [vmem:[%s149 + $0x110] sm:$0xff]
                %188 = vst [vmem:[%s150 + $0x90] sm:$0xff] %v187
                %v189 = vld [vmem:[%s149 + $0x118] sm:$0xff]
                %190 = vst [vmem:[%s150 + $0x98] sm:$0xff] %v189
                %v191 = vld [vmem:[%s149 + $0x120] sm:$0xff]
                %192 = vst [vmem:[%s150 + $0xa0] sm:$0xff] %v191
                %v193 = vld [vmem:[%s149 + $0x128] sm:$0xff]
                %194 = vst [vmem:[%s150 + $0xa8] sm:$0xff] %v193
                %v195 = vld [vmem:[%s149 + $0x130] sm:$0xff]
                %196 = vst [vmem:[%s150 + $0xb0] sm:$0xff] %v195
                %v197 = vld [vmem:[%s149 + $0x138] sm:$0xff]
                %198 = vst [vmem:[%s150 + $0xb8] sm:$0xff] %v197
                %v199 = vld [vmem:[%s149 + $0x180] sm:$0xff]
                %200 = vst [vmem:[%s150 + $0xc0] sm:$0xff] %v199
                %v201 = vld [vmem:[%s149 + $0x188] sm:$0xff]
                %202 = vst [vmem:[%s150 + $0xc8] sm:$0xff] %v201
                %v203 = vld [vmem:[%s149 + $0x190] sm:$0xff]
                %204 = vst [vmem:[%s150 + $0xd0] sm:$0xff] %v203
                %v205 = vld [vmem:[%s149 + $0x198] sm:$0xff]
                %206 = vst [vmem:[%s150 + $0xd8] sm:$0xff] %v205
                %v207 = vld [vmem:[%s149 + $0x1a0] sm:$0xff]
                %208 = vst [vmem:[%s150 + $0xe0] sm:$0xff] %v207
                %v209 = vld [vmem:[%s149 + $0x1a8] sm:$0xff]
                %210 = vst [vmem:[%s150 + $0xe8] sm:$0xff] %v209
                %v211 = vld [vmem:[%s149 + $0x1b0] sm:$0xff]
                %212 = vst [vmem:[%s150 + $0xf0] sm:$0xff] %v211
                %v213 = vld [vmem:[%s149 + $0x1b8] sm:$0xff]
                %214 = vst [vmem:[%s150 + $0xf8] sm:$0xff] %v213
              $region41: #{lenet_forward.4} parent=35 // loop_footer
                %s148 = sadd.s32 1, %s144
              $region42: #{lenet_forward.4} parent=35 // loop_footer_branch
                %143 = sbr.rel target = $region38
              $region43: #{lenet_forward.4} parent=35 // loop_exit
                _
            $region36: #{lenet_forward.4} parent=31 // pred_fallthru
              _
            // Predicated region
            $region44: #{lenet_forward.4} parent=31 // pred_check
              _
            $region45: #{lenet_forward.4} parent=31 // pred_check_branch
              %216 = sbr.rel target = $region47
            $region46: #{lenet_forward.4} parent=31 // pred_region
              _
            $region47: #{lenet_forward.4} parent=31 // pred_fallthru
              _
          $region32: #{lenet_forward.4} parent=27 // pred_fallthru
            _
          %217 = vnop
        $region28: #{lenet_forward.4} parent=23 // pred_fallthru
          _
      $region24: #{lenet_forward.4} parent=5 // pred_fallthru
        _
      %p218 = scmp.le.s32.totalorder 1, %s9
      %p219 = scmp.lt.s32.totalorder %s9, 3
      %p220 = pnand %p218, %p219
      %p221 = pneg %p220
      // Predicated region
      $region48: #{lenet_forward.4} parent=5 // pred_check
        _
      $region49: #{lenet_forward.4} parent=5 // pred_check_branch
        %223 = sbr.rel (%p220) target = $region51
      $region50: #{lenet_forward.4} parent=5 // pred_region
        %s224 = ssub.s32 %s9, 1
        %s225 = sand.u32 %s22, 1
        %s226 = sand.u32 %s22, 1
        %s227 = smul.addr %s226, 256
        %s228 = scalar_lea.vmem [#allocation2], %s227
        // Predicated region
        $region52: #{lenet_forward.4} parent=50 // pred_check
          %p229 = pneg %p35
        $region53: #{lenet_forward.4} parent=50 // pred_check_branch
          %231 = sbr.rel (%p229) target = $region55
        $region54: #{lenet_forward.4} parent=50 // pred_region
          _
        $region55: #{lenet_forward.4} parent=50 // pred_fallthru
          _
        %s232 = sand.u32 %s22, 1
        %s233 = sand.u32 %s22, 1
        %s234 = smul.addr %s233, 256
        %s235 = scalar_lea.vmem [#allocation2], %s234
        %p236 = pneg %p35
        %p237 = pneg %p32
        %p238 = pneg %p56
        %p239 = pneg %p53
        %p240 = pneg %p77
        %p241 = pneg %p74
        %p242 = pneg %p103
        %p243 = pneg %p100
        %s244 = smul.u32 4, %s14
        %p245 = scmp.lt.s32.totalorder %s244, 7
        %s246 = scalar_select %p245, %s244, 7
        %s247 = smul.addr %s246, 8
        %s248 = scalar_lea.vmem %s3, %s247
        %s249 = smul.u32 4, %s14
        %s250 = smul.u32 4, %s14
        %p251 = scmp.lt.s32.totalorder %s250, 7
        %s252 = scalar_select %p251, %s250, 7
        %s253 = smul.addr %s252, 8
        %s254 = scalar_lea.vmem %s3, %s253
        %s255 = smul.u32 4, %s14
        %v256 = vld [vmem:[%s228] sm:$0xff]
        %v257 = vld [vmem:[%s228 + $0x8] sm:$0xff]
        %v258 = vld [vmem:[%s228 + $0x10] sm:$0xff]
        %v259 = vld [vmem:[%s228 + $0x18] sm:$0xff]
        %v260 = vld [vmem:[%s228 + $0x20] sm:$0xff]
        %v261 = vld [vmem:[%s228 + $0x28] sm:$0xff]
        %v262 = vld [vmem:[%s228 + $0x30] sm:$0xff]
        %v263 = vld [vmem:[%s228 + $0x38] sm:$0xff]
        %v264 = vld [vmem:[%s228 + $0x40] sm:$0xff]
        %v265 = vld [vmem:[%s228 + $0x48] sm:$0xff]
        %v266 = vld [vmem:[%s228 + $0x50] sm:$0xff]
        %v267 = vld [vmem:[%s228 + $0x58] sm:$0xff]
        %v268 = vld [vmem:[%s228 + $0x60] sm:$0xff]
        %v269 = vld [vmem:[%s228 + $0x68] sm:$0xff]
        %v270 = vld [vmem:[%s228 + $0x70] sm:$0xff]
        %v271 = vld [vmem:[%s228 + $0x78] sm:$0xff]
        %v272 = vld [vmem:[%s228 + $0x80] sm:$0xff]
        %v273 = vld [vmem:[%s228 + $0x88] sm:$0xff]
        %v274 = vld [vmem:[%s228 + $0x90] sm:$0xff]
        %v275 = vld [vmem:[%s228 + $0x98] sm:$0xff]
        %v276 = vld [vmem:[%s228 + $0xa0] sm:$0xff]
        %v277 = vld [vmem:[%s228 + $0xa8] sm:$0xff]
        %v278 = vld [vmem:[%s228 + $0xb0] sm:$0xff]
        %v279 = vld [vmem:[%s228 + $0xb8] sm:$0xff]
        %v280 = vld [vmem:[%s228 + $0xc0] sm:$0xff]
        %v281 = vld [vmem:[%s228 + $0xc8] sm:$0xff]
        %v282 = vld [vmem:[%s228 + $0xd0] sm:$0xff]
        %v283 = vld [vmem:[%s228 + $0xd8] sm:$0xff]
        %v284 = vld [vmem:[%s228 + $0xe0] sm:$0xff]
        %v285 = vld [vmem:[%s228 + $0xe8] sm:$0xff]
        %v286 = vld [vmem:[%s228 + $0xf0] sm:$0xff]
        %v287 = vld [vmem:[%s228 + $0xf8] sm:$0xff]
        %v288 = vld [vmem:[%s1] sm:$0xff]
        %v289 = vld [vmem:[%s1 + $0x8] sm:$0xff]
        %v290 = vld [vmem:[%s1 + $0x10] sm:$0xff]
        %v291 = vld [vmem:[%s1 + $0x18] sm:$0xff]
        %v292 = vld [vmem:[%s1 + $0x20] sm:$0xff]
        %v293 = vld [vmem:[%s1 + $0x28] sm:$0xff]
        %v294 = vld [vmem:[%s1 + $0x30] sm:$0xff]
        %v295 = vld [vmem:[%s1 + $0x38] sm:$0xff]
        %v296 = vld [vmem:[%s1 + $0x40] sm:$0xff]
        %v297 = vld [vmem:[%s1 + $0x48] sm:$0xff]
        %v298 = vld [vmem:[%s1 + $0x50] sm:$0xff]
        %v299 = vld [vmem:[%s1 + $0x58] sm:$0xff]
        %v300 = vld [vmem:[%s1 + $0x60] sm:$0xff]
        %v301 = vld [vmem:[%s1 + $0x68] sm:$0xff]
        %v302 = vld [vmem:[%s1 + $0x70] sm:$0xff]
        %v303 = vld [vmem:[%s1 + $0x78] sm:$0xff]
        %v304 = vld [vmem:[%s1 + $0x80] sm:$0xff]
        %v305 = vld [vmem:[%s1 + $0x88] sm:$0xff]
        %v306 = vld [vmem:[%s1 + $0x90] sm:$0xff]
        %v307 = vld [vmem:[%s1 + $0x98] sm:$0xff]
        %vm308 = vcmask 261120
        %v310 = vsel %vm308, %v257, 0
        %v313 = vsel %vm308, %v259, 0
        %v316 = vsel %vm308, %v261, 0
        %v319 = vsel %vm308, %v263, 0
        %v322 = vsel %vm308, %v265, 0
        %v325 = vsel %vm308, %v267, 0
        %v328 = vsel %vm308, %v269, 0
        %v331 = vsel %vm308, %v271, 0
        %v334 = vsel %vm308, %v273, 0
        %v337 = vsel %vm308, %v275, 0
        %v340 = vsel %vm308, %v277, 0
        %v343 = vsel %vm308, %v279, 0
        %v346 = vsel %vm308, %v281, 0
        %v349 = vsel %vm308, %v283, 0
        %v352 = vsel %vm308, %v285, 0
        %v355 = vsel %vm308, %v287, 0
        %357 = vmatpush.msra.mxu0 %v303
        %358 = vmatpush.msra.mxu0 %v302
        %359 = vmatpush.msra.mxu0 %v301
        %360 = vmatpush.msra.mxu0 %v300
        %361 = vmatpush.msra.mxu0 %v299
        %362 = vmatpush.msra.mxu0 %v298
        %363 = vmatpush.msra.mxu0 %v297
        %364 = vmatpush.msra.mxu0 %v296
        %365 = vmatpush.msra.mxu0 %v295
        %366 = vmatpush.msra.mxu0 %v294
        %367 = vmatpush.msra.mxu0 %v293
        %368 = vmatpush.msra.mxu0 %v292
        %369 = vmatpush.msra.mxu0 %v291
        %370 = vmatpush.msra.mxu0 %v290
        %371 = vmatpush.msra.mxu0 %v289
        %372 = vmatpush.msra.mxu0 %v288
        %373 = vmatmul.f32.gmra.mxu0 %v256
        %v374 = vpop.f32.mrf.mxu0
        %v375 = vadd.f32 0.0, %v374
        %376 = vmatmul.f32.gmra.mxu0 %v258
        %v377 = vpop.f32.mrf.mxu0
        %v378 = vadd.f32 0.0, %v377
        %379 = vmatmul.f32.gmra.mxu0 %v260
        %v380 = vpop.f32.mrf.mxu0
        %v381 = vadd.f32 0.0, %v380
        %382 = vmatmul.f32.gmra.mxu0 %v262
        %v383 = vpop.f32.mrf.mxu0
        %v384 = vadd.f32 0.0, %v383
        %385 = vmatmul.f32.gmra.mxu0 %v264
        %v386 = vpop.f32.mrf.mxu0
        %v387 = vadd.f32 0.0, %v386
        %388 = vmatmul.f32.gmra.mxu0 %v266
        %v389 = vpop.f32.mrf.mxu0
        %v390 = vadd.f32 0.0, %v389
        %391 = vmatmul.f32.gmra.mxu0 %v268
        %v392 = vpop.f32.mrf.mxu0
        %v393 = vadd.f32 0.0, %v392
        %394 = vmatmul.f32.gmra.mxu0 %v270
        %v395 = vpop.f32.mrf.mxu0
        %v396 = vadd.f32 0.0, %v395
        %397 = vmatmul.f32.gmra.mxu0 %v272
        %v398 = vpop.f32.mrf.mxu0
        %v399 = vadd.f32 0.0, %v398
        %400 = vmatmul.f32.gmra.mxu0 %v274
        %v401 = vpop.f32.mrf.mxu0
        %v402 = vadd.f32 0.0, %v401
        %403 = vmatmul.f32.gmra.mxu0 %v276
        %v404 = vpop.f32.mrf.mxu0
        %v405 = vadd.f32 0.0, %v404
        %406 = vmatmul.f32.gmra.mxu0 %v278
        %v407 = vpop.f32.mrf.mxu0
        %v408 = vadd.f32 0.0, %v407
        %409 = vmatmul.f32.gmra.mxu0 %v280
        %v410 = vpop.f32.mrf.mxu0
        %v411 = vadd.f32 0.0, %v410
        %412 = vmatmul.f32.gmra.mxu0 %v282
        %v413 = vpop.f32.mrf.mxu0
        %v414 = vadd.f32 0.0, %v413
        %415 = vmatmul.f32.gmra.mxu0 %v284
        %v416 = vpop.f32.mrf.mxu0
        %v417 = vadd.f32 0.0, %v416
        %418 = vmatmul.f32.gmra.mxu0 %v286
        %v419 = vpop.f32.mrf.mxu0
        %v420 = vadd.f32 0.0, %v419
        %421 = vdwg.mxu0
        %422 = vmatpush.msra.mxu0 0.0
        %423 = vmatpush.msra.mxu0 0.0
        %424 = vmatpush.msra.mxu0 0.0
        %425 = vmatpush.msra.mxu0 0.0
        %426 = vmatpush.msra.mxu0 0.0
        %427 = vmatpush.msra.mxu0 0.0
        %428 = vmatpush.msra.mxu0 0.0
        %429 = vmatpush.msra.mxu0 0.0
        %430 = vmatpush.msra.mxu0 0.0
        %431 = vmatpush.msra.mxu0 0.0
        %432 = vmatpush.msra.mxu0 0.0
        %433 = vmatpush.msra.mxu0 0.0
        %434 = vmatpush.msra.mxu0 %v307
        %435 = vmatpush.msra.mxu0 %v306
        %436 = vmatpush.msra.mxu0 %v305
        %437 = vmatpush.msra.mxu0 %v304
        %438 = vmatmul.f32.gmra.mxu0 %v310
        %v439 = vpop.f32.mrf.mxu0
        %v440 = vadd.f32 %v375, %v439
        %441 = vmatmul.f32.gmra.mxu0 %v313
        %v442 = vpop.f32.mrf.mxu0
        %v443 = vadd.f32 %v378, %v442
        %444 = vmatmul.f32.gmra.mxu0 %v316
        %v445 = vpop.f32.mrf.mxu0
        %v446 = vadd.f32 %v381, %v445
        %447 = vmatmul.f32.gmra.mxu0 %v319
        %v448 = vpop.f32.mrf.mxu0
        %v449 = vadd.f32 %v384, %v448
        %450 = vmatmul.f32.gmra.mxu0 %v322
        %v451 = vpop.f32.mrf.mxu0
        %v452 = vadd.f32 %v387, %v451
        %453 = vmatmul.f32.gmra.mxu0 %v325
        %v454 = vpop.f32.mrf.mxu0
        %v455 = vadd.f32 %v390, %v454
        %456 = vmatmul.f32.gmra.mxu0 %v328
        %v457 = vpop.f32.mrf.mxu0
        %v458 = vadd.f32 %v393, %v457
        %459 = vmatmul.f32.gmra.mxu0 %v331
        %v460 = vpop.f32.mrf.mxu0
        %v461 = vadd.f32 %v396, %v460
        %462 = vmatmul.f32.gmra.mxu0 %v334
        %v463 = vpop.f32.mrf.mxu0
        %v464 = vadd.f32 %v399, %v463
        %465 = vmatmul.f32.gmra.mxu0 %v337
        %v466 = vpop.f32.mrf.mxu0
        %v467 = vadd.f32 %v402, %v466
        %468 = vmatmul.f32.gmra.mxu0 %v340
        %v469 = vpop.f32.mrf.mxu0
        %v470 = vadd.f32 %v405, %v469
        %471 = vmatmul.f32.gmra.mxu0 %v343
        %v472 = vpop.f32.mrf.mxu0
        %v473 = vadd.f32 %v408, %v472
        %474 = vmatmul.f32.gmra.mxu0 %v346
        %v475 = vpop.f32.mrf.mxu0
        %v476 = vadd.f32 %v411, %v475
        %477 = vmatmul.f32.gmra.mxu0 %v349
        %v478 = vpop.f32.mrf.mxu0
        %v479 = vadd.f32 %v414, %v478
        %480 = vmatmul.f32.gmra.mxu0 %v352
        %v481 = vpop.f32.mrf.mxu0
        %v482 = vadd.f32 %v417, %v481
        %483 = vmatmul.f32.gmra.mxu0 %v355
        %v484 = vpop.f32.mrf.mxu0
        %v485 = vadd.f32 %v420, %v484
        %486 = vdwg.mxu0
        %v487 = vmax.f32 %v440, %v452
        %v488 = vmax.f32 %v443, %v455
        %v489 = vmax.f32 %v446, %v458
        %v490 = vmax.f32 %v449, %v461
        %v491 = vmax.f32 %v464, %v476
        %v492 = vmax.f32 %v467, %v479
        %v493 = vmax.f32 %v470, %v482
        %v494 = vmax.f32 %v473, %v485
        %v495 = vmax.f32 %v487, %v491
        %v496 = vmax.f32 %v488, %v492
        %v497 = vmax.f32 %v489, %v493
        %v498 = vmax.f32 %v490, %v494
        %v499 = vld [vmem:[%s2] sm:$0x1]
        %v501 = vperm.slane %v499, 0
        %v503 = vadd.f32 %v495, %v501
        %v504 = vadd.f32 %v496, %v501
        %v505 = vadd.f32 %v497, %v501
        %v506 = vadd.f32 %v498, %v501
        %v507 = vmax.f32 %v503, 0.0
        %v508 = vmax.f32 %v504, 0.0
        %v509 = vmax.f32 %v505, 0.0
        %v510 = vmax.f32 %v506, 0.0
        %511 = vst [vmem:[%s254] sm:$0xff] %v507
        %512 = vst [vmem:[%s254 + $0x8] sm:$0xff] %v508
        %513 = vst [vmem:[%s254 + $0x10] sm:$0xff] %v509
        %514 = vst [vmem:[%s254 + $0x18] sm:$0xff] %v510
        %s515 = smul.u32 4, %s14
        %p516 = scmp.lt.s32.totalorder %s515, 7
        %s517 = scalar_select %p516, %s515, 7
        %s518 = smul.addr %s517, 8
        %s519 = scalar_lea.vmem %s3, %s518
        // Predicated region
        $region56: #{lenet_forward.4} parent=50 // pred_check
          %p520 = pneg %p100
        $region57: #{lenet_forward.4} parent=50 // pred_check_branch
          %522 = sbr.rel (%p520) target = $region59
        $region58: #{lenet_forward.4} parent=50 // pred_region
          %s523 = smul.u32 4, %s14
        $region59: #{lenet_forward.4} parent=50 // pred_fallthru
          _
      $region51: #{lenet_forward.4} parent=5 // pred_fallthru
        _
      %p524 = scmp.le.s32.totalorder 2, %s9
      // Predicated region
      $region60: #{lenet_forward.4} parent=5 // pred_check
        %p525 = pneg %p524
      $region61: #{lenet_forward.4} parent=5 // pred_check_branch
        %527 = sbr.rel (%p525) target = $region63
      $region62: #{lenet_forward.4} parent=5 // pred_region
        %s528 = ssub.s32 %s9, 2
        // Predicated region
        $region64: #{lenet_forward.4} parent=62 // pred_check
          %p529 = pneg %p106
        $region65: #{lenet_forward.4} parent=62 // pred_check_branch
          %531 = sbr.rel (%p529) target = $region67
        $region66: #{lenet_forward.4} parent=62 // pred_region
          %s532 = smul.u32 4, %s15
          %p533 = scmp.lt.s32.totalorder %s532, 7
          %s534 = scalar_select %p533, %s532, 7
          %s535 = smul.addr %s534, 8
          %s536 = scalar_lea.vmem %s3, %s535
        $region67: #{lenet_forward.4} parent=62 // pred_fallthru
          _
      $region63: #{lenet_forward.4} parent=5 // pred_fallthru
        _
    $region6: #{lenet_forward.4} parent=1 // loop_footer
      %s13 = sadd.s32 1, %s9
    $region7: #{lenet_forward.4} parent=1 // loop_footer_branch
      %8 = sbr.rel target = $region3
    $region8: #{lenet_forward.4} parent=1 // loop_exit
      _

// kernel: lenet_forward.5
$region0: #{lenet_forward.5}
  #allocation0 [shape = 'u32[]', space=smem, size = 0x4, offset = 0x4, fixed_abs, tag = 'smem constant byte address 0x4 - core index']
  #allocation1 [shape = 'u32[72,128]{1,0:T(1,128)}', space=vmem, size = 0x9000, scoped, tag = 'internal scratch']
  %s0 = inlined_call_operand.vmem [shape: f32[8,400], index: 0, kind: input, shape index: {}]
  %s1 = inlined_call_operand.vmem [shape: f32[400,128], index: 1, kind: input, shape index: {}]
  %s2 = inlined_call_operand.vmem [shape: f32[1,128], index: 2, kind: input, shape index: {}]
  %s3 = inlined_call_operand.vmem [shape: f32[128,128], index: 3, kind: input, shape index: {}]
  %s4 = inlined_call_operand.vmem [shape: f32[1,128], index: 4, kind: input, shape index: {}]
  %s5 = inlined_call_operand.vmem [shape: f32[128,128], index: 5, kind: input, shape index: {}]
  %s6 = inlined_call_operand.vmem [shape: f32[1,128], index: 6, kind: input, shape index: {}]
  %s7 = inlined_call_operand.vmem [shape: f32[8,128], index: 7, kind: output, shape index: {}]
  %s8 = sld [smem:[#allocation0]]
  $region38: #{lenet_forward.5} parent=0
    _
  %s10 = ssub.s32 1, %s8
  %s11 = scalar_select 0, %s10, %s8
  // Predicated region
  $region2: #{lenet_forward.5} parent=0 // pred_check
    _
  $region3: #{lenet_forward.5} parent=0 // pred_check_branch
    %13 = sbr.rel (0) target = $region5
  $region4: #{lenet_forward.5} parent=0 // pred_region
    _
  $region5: #{lenet_forward.5} parent=0 // pred_fallthru
    _
  // Predicated region
  $region6: #{lenet_forward.5} parent=0 // pred_check
    _
  $region7: #{lenet_forward.5} parent=0 // pred_check_branch
    %15 = sbr.rel (0) target = $region9
  $region8: #{lenet_forward.5} parent=0 // pred_region
    _
  $region9: #{lenet_forward.5} parent=0 // pred_fallthru
    _
  // Predicated region
  $region10: #{lenet_forward.5} parent=0 // pred_check
    _
  $region11: #{lenet_forward.5} parent=0 // pred_check_branch
    %17 = sbr.rel (0) target = $region13
  $region12: #{lenet_forward.5} parent=0 // pred_region
    _
  $region13: #{lenet_forward.5} parent=0 // pred_fallthru
    _
  // Predicated region
  $region14: #{lenet_forward.5} parent=0 // pred_check
    _
  $region15: #{lenet_forward.5} parent=0 // pred_check_branch
    %19 = sbr.rel (0) target = $region17
  $region16: #{lenet_forward.5} parent=0 // pred_region
    _
  $region17: #{lenet_forward.5} parent=0 // pred_fallthru
    _
  // Predicated region
  $region18: #{lenet_forward.5} parent=0 // pred_check
    _
  $region19: #{lenet_forward.5} parent=0 // pred_check_branch
    %21 = sbr.rel (0) target = $region21
  $region20: #{lenet_forward.5} parent=0 // pred_region
    _
  $region21: #{lenet_forward.5} parent=0 // pred_fallthru
    _
  // Predicated region
  $region22: #{lenet_forward.5} parent=0 // pred_check
    _
  $region23: #{lenet_forward.5} parent=0 // pred_check_branch
    %23 = sbr.rel (0) target = $region25
  $region24: #{lenet_forward.5} parent=0 // pred_region
    _
  $region25: #{lenet_forward.5} parent=0 // pred_fallthru
    _
  // Predicated region
  $region26: #{lenet_forward.5} parent=0 // pred_check
    _
  $region27: #{lenet_forward.5} parent=0 // pred_check_branch
    %25 = sbr.rel (0) target = $region29
  $region28: #{lenet_forward.5} parent=0 // pred_region
    _
  $region29: #{lenet_forward.5} parent=0 // pred_fallthru
    _
  %v26 = vld [vmem:[%s0] sm:$0xff]
  %v27 = vld [vmem:[%s0 + $0x8] sm:$0xff]
  %v28 = vld [vmem:[%s0 + $0x10] sm:$0xff]
  %v29 = vld [vmem:[%s0 + $0x18] sm:$0xff]
  %v30 = vld [vmem:[%s1] sm:$0xff]
  %v31 = vld [vmem:[%s1 + $0x8] sm:$0xff]
  %v32 = vld [vmem:[%s1 + $0x10] sm:$0xff]
  %v33 = vld [vmem:[%s1 + $0x18] sm:$0xff]
  %v34 = vld [vmem:[%s1 + $0x20] sm:$0xff]
  %v35 = vld [vmem:[%s1 + $0x28] sm:$0xff]
  %v36 = vld [vmem:[%s1 + $0x30] sm:$0xff]
  %v37 = vld [vmem:[%s1 + $0x38] sm:$0xff]
  %v38 = vld [vmem:[%s1 + $0x40] sm:$0xff]
  %v39 = vld [vmem:[%s1 + $0x48] sm:$0xff]
  %v40 = vld [vmem:[%s1 + $0x50] sm:$0xff]
  %v41 = vld [vmem:[%s1 + $0x58] sm:$0xff]
  %v42 = vld [vmem:[%s1 + $0x60] sm:$0xff]
  %v43 = vld [vmem:[%s1 + $0x68] sm:$0xff]
  %v44 = vld [vmem:[%s1 + $0x70] sm:$0xff]
  %v45 = vld [vmem:[%s1 + $0x78] sm:$0xff]
  %v46 = vld [vmem:[%s1 + $0x80] sm:$0xff]
  %v47 = vld [vmem:[%s1 + $0x88] sm:$0xff]
  %v48 = vld [vmem:[%s1 + $0x90] sm:$0xff]
  %v49 = vld [vmem:[%s1 + $0x98] sm:$0xff]
  %v50 = vld [vmem:[%s1 + $0xa0] sm:$0xff]
  %v51 = vld [vmem:[%s1 + $0xa8] sm:$0xff]
  %v52 = vld [vmem:[%s1 + $0xb0] sm:$0xff]
  %v53 = vld [vmem:[%s1 + $0xb8] sm:$0xff]
  %v54 = vld [vmem:[%s1 + $0xc0] sm:$0xff]
  %v55 = vld [vmem:[%s1 + $0xc8] sm:$0xff]
  %v56 = vld [vmem:[%s1 + $0xd0] sm:$0xff]
  %v57 = vld [vmem:[%s1 + $0xd8] sm:$0xff]
  %v58 = vld [vmem:[%s1 + $0xe0] sm:$0xff]
  %v59 = vld [vmem:[%s1 + $0xe8] sm:$0xff]
  %v60 = vld [vmem:[%s1 + $0xf0] sm:$0xff]
  %v61 = vld [vmem:[%s1 + $0xf8] sm:$0xff]
  %v62 = vld [vmem:[%s1 + $0x100] sm:$0xff]
  %v63 = vld [vmem:[%s1 + $0x108] sm:$0xff]
  %v64 = vld [vmem:[%s1 + $0x110] sm:$0xff]
  %v65 = vld [vmem:[%s1 + $0x118] sm:$0xff]
  %v66 = vld [vmem:[%s1 + $0x120] sm:$0xff]
  %v67 = vld [vmem:[%s1 + $0x128] sm:$0xff]
  %v68 = vld [vmem:[%s1 + $0x130] sm:$0xff]
  %v69 = vld [vmem:[%s1 + $0x138] sm:$0xff]
  %v70 = vld [vmem:[%s1 + $0x140] sm:$0xff]
  %v71 = vld [vmem:[%s1 + $0x148] sm:$0xff]
  %v72 = vld [vmem:[%s1 + $0x150] sm:$0xff]
  %v73 = vld [vmem:[%s1 + $0x158] sm:$0xff]
  %v74 = vld [vmem:[%s1 + $0x160] sm:$0xff]
  %v75 = vld [vmem:[%s1 + $0x168] sm:$0xff]
  %v76 = vld [vmem:[%s1 + $0x170] sm:$0xff]
  %v77 = vld [vmem:[%s1 + $0x178] sm:$0xff]
  %v78 = vld [vmem:[%s1 + $0x180] sm:$0xff]
  %v79 = vld [vmem:[%s1 + $0x188] sm:$0xff]
  %v80 = vld [vmem:[%s2] sm:$0x1]
  %v82 = vperm.slane %v80, 0
  %vm84 = vcmask 130048
  %v86 = vsel %vm84, %v29, 0
  %88 = vmatpush.msra.mxu0 %v45
  %89 = vmatpush.msra.mxu0 %v44
  %90 = vmatpush.msra.mxu0 %v43
  %91 = vmatpush.msra.mxu0 %v42
  %92 = vmatpush.msra.mxu0 %v41
  %93 = vmatpush.msra.mxu0 %v40
  %94 = vmatpush.msra.mxu0 %v39
  %95 = vmatpush.msra.mxu0 %v38
  %96 = vmatpush.msra.mxu0 %v37
  %97 = vmatpush.msra.mxu0 %v36
  %98 = vmatpush.msra.mxu0 %v35
  %99 = vmatpush.msra.mxu0 %v34
  %100 = vmatpush.msra.mxu0 %v33
  %101 = vmatpush.msra.mxu0 %v32
  %102 = vmatpush.msra.mxu0 %v31
  %103 = vmatpush.msra.mxu0 %v30
  %104 = vmatmul.f32.gmra.mxu0 %v26
  %v105 = vpop.f32.mrf.mxu0
  %v106 = vadd.f32 %v82, %v105
  %107 = vdwg.mxu0
  %108 = vmatpush.msra.mxu0 %v61
  %109 = vmatpush.msra.mxu0 %v60
  %110 = vmatpush.msra.mxu0 %v59
  %111 = vmatpush.msra.mxu0 %v58
  %112 = vmatpush.msra.mxu0 %v57
  %113 = vmatpush.msra.mxu0 %v56
  %114 = vmatpush.msra.mxu0 %v55
  %115 = vmatpush.msra.mxu0 %v54
  %116 = vmatpush.msra.mxu0 %v53
  %117 = vmatpush.msra.mxu0 %v52
  %118 = vmatpush.msra.mxu0 %v51
  %119 = vmatpush.msra.mxu0 %v50
  %120 = vmatpush.msra.mxu0 %v49
  %121 = vmatpush.msra.mxu0 %v48
  %122 = vmatpush.msra.mxu0 %v47
  %123 = vmatpush.msra.mxu0 %v46
  %124 = vmatmul.f32.gmra.mxu0 %v27
  %v125 = vpop.f32.mrf.mxu0
  %v126 = vadd.f32 %v106, %v125
  %127 = vdwg.mxu0
  %128 = vmatpush.msra.mxu0 %v77
  %129 = vmatpush.msra.mxu0 %v76
  %130 = vmatpush.msra.mxu0 %v75
  %131 = vmatpush.msra.mxu0 %v74
  %132 = vmatpush.msra.mxu0 %v73
  %133 = vmatpush.msra.mxu0 %v72
  %134 = vmatpush.msra.mxu0 %v71
  %135 = vmatpush.msra.mxu0 %v70
  %136 = vmatpush.msra.mxu0 %v69
  %137 = vmatpush.msra.mxu0 %v68
  %138 = vmatpush.msra.mxu0 %v67
  %139 = vmatpush.msra.mxu0 %v66
  %140 = vmatpush.msra.mxu0 %v65
  %141 = vmatpush.msra.mxu0 %v64
  %142 = vmatpush.msra.mxu0 %v63
  %143 = vmatpush.msra.mxu0 %v62
  %144 = vmatmul.f32.gmra.mxu0 %v28
  %v145 = vpop.f32.mrf.mxu0
  %v146 = vadd.f32 %v126, %v145
  %147 = vdwg.mxu0
  %148 = vmatpush.msra.mxu0 0.0
  %149 = vmatpush.msra.mxu0 0.0
  %150 = vmatpush.msra.mxu0 0.0
  %151 = vmatpush.msra.mxu0 0.0
  %152 = vmatpush.msra.mxu0 0.0
  %153 = vmatpush.msra.mxu0 0.0
  %154 = vmatpush.msra.mxu0 0.0
  %155 = vmatpush.msra.mxu0 0.0
  %156 = vmatpush.msra.mxu0 0.0
  %157 = vmatpush.msra.mxu0 0.0
  %158 = vmatpush.msra.mxu0 0.0
  %159 = vmatpush.msra.mxu0 0.0
  %160 = vmatpush.msra.mxu0 0.0
  %161 = vmatpush.msra.mxu0 0.0
  %162 = vmatpush.msra.mxu0 %v79
  %163 = vmatpush.msra.mxu0 %v78
  %164 = vmatmul.f32.gmra.mxu0 %v86
  %v165 = vpop.f32.mrf.mxu0
  %v166 = vadd.f32 %v146, %v165
  %167 = vdwg.mxu0
  %v168 = vmax.f32 %v166, 0.0
  %v169 = vld [vmem:[%s3] sm:$0xff]
  %v170 = vld [vmem:[%s3 + $0x8] sm:$0xff]
  %v171 = vld [vmem:[%s3 + $0x10] sm:$0xff]
  %v172 = vld [vmem:[%s3 + $0x18] sm:$0xff]
  %v173 = vld [vmem:[%s3 + $0x20] sm:$0xff]
  %v174 = vld [vmem:[%s3 + $0x28] sm:$0xff]
  %v175 = vld [vmem:[%s3 + $0x30] sm:$0xff]
  %v176 = vld [vmem:[%s3 + $0x38] sm:$0xff]
  %v177 = vld [vmem:[%s3 + $0x40] sm:$0xff]
  %v178 = vld [vmem:[%s3 + $0x48] sm:$0xff]
  %v179 = vld [vmem:[%s3 + $0x50] sm:$0xff]
  %v180 = vld [vmem:[%s3 + $0x58] sm:$0xff]
  %v181 = vld [vmem:[%s3 + $0x60] sm:$0xff]
  %v182 = vld [vmem:[%s3 + $0x68] sm:$0xff]
  %v183 = vld [vmem:[%s3 + $0x70] sm:$0xff]
  %v184 = vld [vmem:[%s3 + $0x78] sm:$0xff]
  %v185 = vld [vmem:[%s4] sm:$0x1]
  %v187 = vperm.slane %v185, 0
  %189 = vmatpush.msra.mxu0 %v184
  %190 = vmatpush.msra.mxu0 %v183
  %191 = vmatpush.msra.mxu0 %v182
  %192 = vmatpush.msra.mxu0 %v181
  %193 = vmatpush.msra.mxu0 %v180
  %194 = vmatpush.msra.mxu0 %v179
  %195 = vmatpush.msra.mxu0 %v178
  %196 = vmatpush.msra.mxu0 %v177
  %197 = vmatpush.msra.mxu0 %v176
  %198 = vmatpush.msra.mxu0 %v175
  %199 = vmatpush.msra.mxu0 %v174
  %200 = vmatpush.msra.mxu0 %v173
  %201 = vmatpush.msra.mxu0 %v172
  %202 = vmatpush.msra.mxu0 %v171
  %203 = vmatpush.msra.mxu0 %v170
  %204 = vmatpush.msra.mxu0 %v169
  %205 = vmatmul.f32.gmra.mxu0 %v168
  %v206 = vpop.f32.mrf.mxu0
  %v207 = vadd.f32 %v187, %v206
  %208 = vdwg.mxu0
  %v209 = vmax.f32 %v207, 0.0
  %v210 = vld [vmem:[%s5] sm:$0xff]
  %v211 = vld [vmem:[%s5 + $0x8] sm:$0xff]
  %v212 = vld [vmem:[%s5 + $0x10] sm:$0xff]
  %v213 = vld [vmem:[%s5 + $0x18] sm:$0xff]
  %v214 = vld [vmem:[%s5 + $0x20] sm:$0xff]
  %v215 = vld [vmem:[%s5 + $0x28] sm:$0xff]
  %v216 = vld [vmem:[%s5 + $0x30] sm:$0xff]
  %v217 = vld [vmem:[%s5 + $0x38] sm:$0xff]
  %v218 = vld [vmem:[%s5 + $0x40] sm:$0xff]
  %v219 = vld [vmem:[%s5 + $0x48] sm:$0xff]
  %v220 = vld [vmem:[%s5 + $0x50] sm:$0xff]
  %v221 = vld [vmem:[%s5 + $0x58] sm:$0xff]
  %v222 = vld [vmem:[%s5 + $0x60] sm:$0xff]
  %v223 = vld [vmem:[%s5 + $0x68] sm:$0xff]
  %v224 = vld [vmem:[%s5 + $0x70] sm:$0xff]
  %v225 = vld [vmem:[%s5 + $0x78] sm:$0xff]
  %v226 = vld [vmem:[%s6] sm:$0x1]
  %v228 = vperm.slane %v226, 0
  %230 = vmatpush.msra.mxu0 %v225
  %231 = vmatpush.msra.mxu0 %v224
  %232 = vmatpush.msra.mxu0 %v223
  %233 = vmatpush.msra.mxu0 %v222
  %234 = vmatpush.msra.mxu0 %v221
  %235 = vmatpush.msra.mxu0 %v220
  %236 = vmatpush.msra.mxu0 %v219
  %237 = vmatpush.msra.mxu0 %v218
  %238 = vmatpush.msra.mxu0 %v217
  %239 = vmatpush.msra.mxu0 %v216
  %240 = vmatpush.msra.mxu0 %v215
  %241 = vmatpush.msra.mxu0 %v214
  %242 = vmatpush.msra.mxu0 %v213
  %243 = vmatpush.msra.mxu0 %v212
  %244 = vmatpush.msra.mxu0 %v211
  %245 = vmatpush.msra.mxu0 %v210
  %246 = vmatmul.f32.gmra.mxu0 %v209
  %v247 = vpop.f32.mrf.mxu0
  %v248 = vadd.f32 %v228, %v247
  %249 = vdwg.mxu0
  %250 = vst [vmem:[%s7] sm:$0xff] %v248
  // Predicated region
  $region30: #{lenet_forward.5} parent=0 // pred_check
    _
  $region31: #{lenet_forward.5} parent=0 // pred_check_branch
    %252 = sbr.rel (0) target = $region33
  $region32: #{lenet_forward.5} parent=0 // pred_region
    _
  $region33: #{lenet_forward.5} parent=0 // pred_fallthru
    _
  // Predicated region
  $region34: #{lenet_forward.5} parent=0 // pred_check
    _
  $region35: #{lenet_forward.5} parent=0 // pred_check_branch
    %254 = sbr.rel (0) target = $region37
  $region36: #{lenet_forward.5} parent=0 // pred_region
    _
  $region37: #{lenet_forward.5} parent=0 // pred_fallthru
    _

</llo_original>
